<compile_context>
chip_gen: v7x
topology: tpu7x:2x2x1
jax: 0.10.0
libtpu: 0.0.40
codegen_flags: <defaults>
</compile_context>

<pallas_src>
import functools

import jax
import jax.numpy as jnp
from jax.experimental import pallas as pl
from jax.experimental.pallas import tpu as pltpu

HIDDEN = 512  # fixed by the module (conv1 -> 512 channels)


def lastnet_kernel(x_ref, w1_ref, b1_ref, w2_ref, b2_ref, o_ref, *, conv2_bf16):
    # x_ref:  (1, C_in, tT)   NCT block (time on lanes)
    # w1_ref: (512, C_in)     conv1 weight (PyTorch (out, in, 1) squeezed)
    # b1_ref: (512, 1)
    # w2_ref: (C_out, 512)    conv2 weight
    # b2_ref: (C_out, 1)
    # o_ref:  (1, C_out, tT)
    x = jnp.maximum(x_ref[0], 0.0)                    # relu(x), (C_in, tT)
    c_in = x_ref.shape[1]

    # conv1 on the VPU: contraction length is tiny (C_in), so an MXU pass is
    # almost entirely padding.  Unrolled broadcast multiply-accumulates use
    # the VALU slot and overlap with conv2's MXU work.
    w1 = w1_ref[...]                                  # (512, C_in)
    h = w1[:, 0:1] * x[0:1, :]
    for c in range(1, c_in):
        h = h + w1[:, c : c + 1] * x[c : c + 1, :]
    h = jnp.maximum(h + b1_ref[...], 0.0)             # relu(conv1), (512, tT)

    # conv2 on the MXU (K = 512 is real MXU work).
    if conv2_bf16:
        y = jnp.dot(w2_ref[...].astype(jnp.bfloat16), h.astype(jnp.bfloat16),
                    preferred_element_type=jnp.float32)
    else:
        y = jnp.dot(w2_ref[...], h, preferred_element_type=jnp.float32)
    o_ref[0] = (y + b2_ref[...]).astype(o_ref.dtype)


def _pick_time_tile(T, cap=4096):
    """Lane-dense (multiple-of-128) time tile, capped for VMEM budgeting.

    No divisibility requirement: the grid uses cdiv and Pallas masks the
    ragged last block.  The cap keeps the (512, tT) f32 intermediate at
    <= 8 MiB, which fits comfortably on every generation (incl. v7x 64 MiB).
    """
    if T <= 128:
        return T                       # full-extent block (always legal)
    return min(cap, (T // 128) * 128)


def lastnet_forward(x_nct, w1, b1, w2, b2, *, conv2_bf16=False, time_tile=None):
    """x_nct: (N, C_in, T) float32. w1: (512, C_in), b1: (512,),
    w2: (C_out, 512), b2: (C_out,). Returns (N, C_out, T)."""
    N, C_in, T = x_nct.shape
    C_out = w2.shape[0]
    tT = time_tile if time_tile is not None else _pick_time_tile(T)
    grid = (N, pl.cdiv(T, tT))

    # Explicit VMEM budget: ~4x the (512, tT) f32 intermediate (h + relu/bias
    # temps), double-buffered x/out blocks, padded weights, plus slack.  Keep
    # below v7x's 64 MiB physical VMEM; raise above v5e's 16 MiB default
    # scoped limit only when the tiles need it.
    h_bytes = HIDDEN * tT * 4
    io_bytes = 2 * 2 * (C_in + C_out) * tT * 4
    w_bytes = (HIDDEN * 128 + C_out * HIDDEN + 2 * HIDDEN) * 4
    vmem_limit = int(min(56 * 2**20,
                         max(16 * 2**20, 4 * h_bytes + io_bytes + w_bytes)))

    kernel = functools.partial(lastnet_kernel, conv2_bf16=conv2_bf16)

    return pl.pallas_call(
        kernel,
        out_shape=jax.ShapeDtypeStruct((N, C_out, T), x_nct.dtype),
        grid=grid,
        in_specs=[
            pl.BlockSpec((1, C_in, tT), lambda n, t: (n, 0, t)),
            pl.BlockSpec((HIDDEN, C_in), lambda n, t: (0, 0)),
            pl.BlockSpec((HIDDEN, 1), lambda n, t: (0, 0)),
            pl.BlockSpec((C_out, HIDDEN), lambda n, t: (0, 0)),
            pl.BlockSpec((C_out, 1), lambda n, t: (0, 0)),
        ],
        out_specs=pl.BlockSpec((1, C_out, tT), lambda n, t: (n, 0, t)),
        compiler_params=pltpu.CompilerParams(
            dimension_semantics=("parallel", "parallel"),
            vmem_limit_bytes=vmem_limit),
    )(x_nct, w1, b1.reshape(HIDDEN, 1), w2, b2.reshape(C_out, 1))


def lastnet_reference(x_nct, w1, b1, w2, b2):
    """Pure-JAX reference matching PyTorch Conv1d(kernel_size=1) semantics."""
    h = jnp.maximum(x_nct, 0.0)
    h = jnp.einsum("oc,nct->not", w1, h) + b1[None, :, None]
    h = jnp.maximum(h, 0.0)
    y = jnp.einsum("oc,nct->not", w2, h) + b2[None, :, None]
    return y


if __name__ == "__main__":
    N, C_IN, C_OUT = 2, 4, 8

    key = jax.random.PRNGKey(0)
    kx, k1, k2, k3, k4 = jax.random.split(key, 5)

    # Parameter shapes follow nn.Conv1d(in, out, 1): weight (out,in,1)->(out,in), bias (out,)
    w1 = (jax.random.normal(k1, (HIDDEN, C_IN), dtype=jnp.float32)
          * (1.0 / jnp.sqrt(C_IN)))
    b1 = jax.random.normal(k2, (HIDDEN,), dtype=jnp.float32) * 0.01
    w2 = (jax.random.normal(k3, (C_OUT, HIDDEN), dtype=jnp.float32)
          * (1.0 / jnp.sqrt(HIDDEN)))
    b2 = jax.random.normal(k4, (C_OUT,), dtype=jnp.float32) * 0.01

    def run_case(T, time_tile=None):
        x = jax.random.normal(jax.random.fold_in(kx, T), (N, C_IN, T),
                              dtype=jnp.float32)
        y = jax.block_until_ready(
            lastnet_forward(x, w1, b1, w2, b2, time_tile=time_tile))
        y_ref = lastnet_reference(x, w1, b1, w2, b2)
        assert y.shape == (N, C_OUT, T), y.shape
        assert jnp.allclose(y, y_ref, atol=1e-4, rtol=1e-4), f"mismatch T={T}"
        return x, y_ref

    run_case(256)                     # single lane-dense block
    run_case(200)                     # ragged last block via cdiv grid
    run_case(384, time_tile=128)      # multi-block pipelined path

    # Optional bf16 MXU operands for conv2 (f32 accumulate) -- loose tolerance.
    x, y_ref = run_case(256)
    y_bf16 = jax.block_until_ready(
        lastnet_forward(x, w1, b1, w2, b2, conv2_bf16=True))
    assert jnp.allclose(y_bf16, y_ref, atol=1e-1, rtol=1e-1), "bf16 conv2 mismatch"

    print("KERNEL_OK")
</pallas_src>

<mosaic_0001>
module attributes {stable_mosaic.version = 11 : i64} {
  func.func @lastnet_kernel(%arg0: i32, %arg1: i32, %arg2: memref<1x4x256xf32, #tpu.memory_space<vmem>>, %arg3: memref<512x4xf32, #tpu.memory_space<vmem>>, %arg4: memref<512x1xf32, #tpu.memory_space<vmem>>, %arg5: memref<8x512xf32, #tpu.memory_space<vmem>>, %arg6: memref<8x1xf32, #tpu.memory_space<vmem>>, %arg7: memref<1x8x256xf32, #tpu.memory_space<vmem>>) attributes {dimension_semantics = [#tpu.dimension_semantics<parallel>, #tpu.dimension_semantics<parallel>], iteration_bounds = array<i64: 2, 1>, scalar_prefetch = 0 : i64, scratch_operands = 0 : i64, tpu.core_type = #tpu.core_type<tc>, window_params = [{transform_indices = @transform_0, window_bounds = array<i64: 1, 4, 256>}, {pipeline_mode = #tpu.pipeline_mode<synchronous>, transform_indices = @transform_1, window_bounds = array<i64: 512, 4>}, {pipeline_mode = #tpu.pipeline_mode<synchronous>, transform_indices = @transform_2, window_bounds = array<i64: 512, 1>}, {pipeline_mode = #tpu.pipeline_mode<synchronous>, transform_indices = @transform_3, window_bounds = array<i64: 8, 512>}, {pipeline_mode = #tpu.pipeline_mode<synchronous>, transform_indices = @transform_4, window_bounds = array<i64: 8, 1>}, {transform_indices = @transform_5, window_bounds = array<i64: 1, 8, 256>}]} {
    %c0 = arith.constant 0 : index
    %c0_0 = arith.constant 0 : index
    %c0_1 = arith.constant 0 : index
    %0 = vector.load %arg2[%c0, %c0_0, %c0_1] : memref<1x4x256xf32, #tpu.memory_space<vmem>>, vector<1x4x256xf32>
    %1 = vector.shape_cast %0 : vector<1x4x256xf32> to vector<4x256xf32>
    %cst = arith.constant 0.000000e+00 : f32
    %2 = vector.broadcast %cst : f32 to vector<4x256xf32>
    %3 = arith.maximumf %1, %2 : vector<4x256xf32>
    %c0_2 = arith.constant 0 : index
    %c0_3 = arith.constant 0 : index
    %4 = vector.load %arg3[%c0_2, %c0_3] : memref<512x4xf32, #tpu.memory_space<vmem>>, vector<512x4xf32>
    %5 = vector.extract_strided_slice %4 {offsets = [0, 0], sizes = [512, 1], strides = [1, 1]} : vector<512x4xf32> to vector<512x1xf32>
    %6 = vector.extract_strided_slice %3 {offsets = [0, 0], sizes = [1, 256], strides = [1, 1]} : vector<4x256xf32> to vector<1x256xf32>
    %7 = vector.broadcast %5 : vector<512x1xf32> to vector<512x256xf32>
    %8 = vector.broadcast %6 : vector<1x256xf32> to vector<512x256xf32>
    %9 = arith.mulf %7, %8 : vector<512x256xf32>
    %10 = vector.extract_strided_slice %4 {offsets = [0, 1], sizes = [512, 1], strides = [1, 1]} : vector<512x4xf32> to vector<512x1xf32>
    %11 = vector.extract_strided_slice %3 {offsets = [1, 0], sizes = [1, 256], strides = [1, 1]} : vector<4x256xf32> to vector<1x256xf32>
    %12 = vector.broadcast %10 : vector<512x1xf32> to vector<512x256xf32>
    %13 = vector.broadcast %11 : vector<1x256xf32> to vector<512x256xf32>
    %14 = arith.mulf %12, %13 : vector<512x256xf32>
    %15 = arith.addf %9, %14 : vector<512x256xf32>
    %16 = vector.extract_strided_slice %4 {offsets = [0, 2], sizes = [512, 1], strides = [1, 1]} : vector<512x4xf32> to vector<512x1xf32>
    %17 = vector.extract_strided_slice %3 {offsets = [2, 0], sizes = [1, 256], strides = [1, 1]} : vector<4x256xf32> to vector<1x256xf32>
    %18 = vector.broadcast %16 : vector<512x1xf32> to vector<512x256xf32>
    %19 = vector.broadcast %17 : vector<1x256xf32> to vector<512x256xf32>
    %20 = arith.mulf %18, %19 : vector<512x256xf32>
    %21 = arith.addf %15, %20 : vector<512x256xf32>
    %22 = vector.extract_strided_slice %4 {offsets = [0, 3], sizes = [512, 1], strides = [1, 1]} : vector<512x4xf32> to vector<512x1xf32>
    %23 = vector.extract_strided_slice %3 {offsets = [3, 0], sizes = [1, 256], strides = [1, 1]} : vector<4x256xf32> to vector<1x256xf32>
    %24 = vector.broadcast %22 : vector<512x1xf32> to vector<512x256xf32>
    %25 = vector.broadcast %23 : vector<1x256xf32> to vector<512x256xf32>
    %26 = arith.mulf %24, %25 : vector<512x256xf32>
    %27 = arith.addf %21, %26 : vector<512x256xf32>
    %c0_4 = arith.constant 0 : index
    %c0_5 = arith.constant 0 : index
    %28 = vector.load %arg4[%c0_4, %c0_5] : memref<512x1xf32, #tpu.memory_space<vmem>>, vector<512x1xf32>
    %29 = vector.broadcast %28 : vector<512x1xf32> to vector<512x256xf32>
    %30 = arith.addf %27, %29 : vector<512x256xf32>
    %cst_6 = arith.constant 0.000000e+00 : f32
    %31 = vector.broadcast %cst_6 : f32 to vector<512x256xf32>
    %32 = arith.maximumf %30, %31 : vector<512x256xf32>
    %c0_7 = arith.constant 0 : index
    %c0_8 = arith.constant 0 : index
    %33 = vector.load %arg5[%c0_7, %c0_8] : memref<8x512xf32, #tpu.memory_space<vmem>>, vector<8x512xf32>
    %cst_9 = arith.constant dense<0.000000e+00> : vector<8x256xf32>
    %34 = tpu.matmul %33, %32, %cst_9 {dimension_numbers = #tpu.dot_dimension_numbers<[1], [0], [0], [1], [0, 0, 1, 1], [], []>} : vector<8x512xf32>, vector<512x256xf32>, vector<8x256xf32> -> vector<8x256xf32>
    %c0_10 = arith.constant 0 : index
    %c0_11 = arith.constant 0 : index
    %35 = vector.load %arg6[%c0_10, %c0_11] : memref<8x1xf32, #tpu.memory_space<vmem>>, vector<8x1xf32>
    %36 = vector.broadcast %35 : vector<8x1xf32> to vector<8x256xf32>
    %37 = arith.addf %34, %36 : vector<8x256xf32>
    %c0_12 = arith.constant 0 : index
    %c0_13 = arith.constant 0 : index
    %c0_14 = arith.constant 0 : index
    %38 = vector.load %arg7[%c0_12, %c0_13, %c0_14] : memref<1x8x256xf32, #tpu.memory_space<vmem>>, vector<1x8x256xf32>
    %39 = vector.shape_cast %38 : vector<1x8x256xf32> to vector<8x256xf32>
    %40 = vector.shape_cast %37 : vector<8x256xf32> to vector<1x8x256xf32>
    tpu.vector_store %arg7[%c0_12, %c0_13, %c0_14], %40 {strides = array<i32>} : memref<1x8x256xf32, #tpu.memory_space<vmem>>, vector<1x8x256xf32>,
    return
  }
  func.func @transform_0(%arg0: i32, %arg1: i32) -> (i32, i32, i32) {
    %c0_i32 = arith.constant 0 : i32
    %c0_i32_0 = arith.constant 0 : i32
    return %arg0, %c0_i32, %arg1 : i32, i32, i32
  }
  func.func @transform_1(%arg0: i32, %arg1: i32) -> (i32, i32) {
    %c0_i32 = arith.constant 0 : i32
    %c0_i32_0 = arith.constant 0 : i32
    %c0_i32_1 = arith.constant 0 : i32
    return %c0_i32, %c0_i32_0 : i32, i32
  }
  func.func @transform_2(%arg0: i32, %arg1: i32) -> (i32, i32) {
    %c0_i32 = arith.constant 0 : i32
    %c0_i32_0 = arith.constant 0 : i32
    %c0_i32_1 = arith.constant 0 : i32
    return %c0_i32, %c0_i32_0 : i32, i32
  }
  func.func @transform_3(%arg0: i32, %arg1: i32) -> (i32, i32) {
    %c0_i32 = arith.constant 0 : i32
    %c0_i32_0 = arith.constant 0 : i32
    %c0_i32_1 = arith.constant 0 : i32
    return %c0_i32, %c0_i32_0 : i32, i32
  }
  func.func @transform_4(%arg0: i32, %arg1: i32) -> (i32, i32) {
    %c0_i32 = arith.constant 0 : i32
    %c0_i32_0 = arith.constant 0 : i32
    %c0_i32_1 = arith.constant 0 : i32
    return %c0_i32, %c0_i32_0 : i32, i32
  }
  func.func @transform_5(%arg0: i32, %arg1: i32) -> (i32, i32, i32) {
    %c0_i32 = arith.constant 0 : i32
    %c0_i32_0 = arith.constant 0 : i32
    return %arg0, %c0_i32, %arg1 : i32, i32, i32
  }
}

</mosaic_0001>

<llo_original>
// kernel: tpu_custom_call.1
$region0: #{tpu_custom_call.1}
  #allocation0 [shape = 'u32[]', space=smem, size = 0x4, offset = 0x4, fixed_abs, tag = 'smem constant byte address 0x4 - core index']
  #allocation1 [shape = 'u32[144,128]{1,0:T(1,128)}', space=vmem, size = 0x12000, scoped, tag = 'internal scratch']
  %s0 = inlined_call_operand.vmem [shape: f32[2,4,256], index: 0, kind: input, shape index: {}]
  %s1 = inlined_call_operand.vmem [shape: f32[512,4], index: 1, kind: input, shape index: {}]
  %s2 = inlined_call_operand.vmem [shape: f32[512,1], index: 2, kind: input, shape index: {}]
  %s3 = inlined_call_operand.vmem [shape: f32[8,512], index: 3, kind: input, shape index: {}]
  %s4 = inlined_call_operand.vmem [shape: f32[8,1], index: 4, kind: input, shape index: {}]
  %s5 = inlined_call_operand.hbm [shape: f32[2,8,256], index: 5, kind: output, shape index: {}]
  %s6 = sld [smem:[#allocation0]]
  $region53: #{tpu_custom_call.1} parent=0
    _
  %s8 = ssub.s32 1, %s6
  %s9 = scalar_select 0, %s8, %s6
  $region1: #{tpu_custom_call.1} parent=0
    #allocation2 [shape = 'u8[16384]{0}', space=vmem, size = 0x4000, scoped, tag = 'output window, operand 0']
    #allocation3 [shape = 's32[2]{0}', space=sflag, size = 0x8, scoped, tag = 'scoped memory for tpu_custom_call.1']
    %10 = vsyncpa [#allocation3], 0
    %s11 = scalar_lea.sflag [#allocation3], 1
    %12 = vsyncpa %s11, 0
    loop: start=0, step=1, limit=4
    $region2: #{tpu_custom_call.1} parent=1 // loop_pre_header
      _
    $region3: #{tpu_custom_call.1} parent=1 // loop_header
      %s14 = sphi 0, %s18
      %p15 = scmp.ge.s32.totalorder %s14, 4
      %s21 = sphi 0, %s33
      %s22 = sphi 0, %s29
      %s23 = sphi 0, %s21
      %s24 = sphi 0, %s22
      %s25 = sphi 0, %s23
      %s26 = sphi 0, %s24
      %s38 = sphi 0, %s40
      %s41 = sphi 0, %s38
      %s42 = sphi 0, %s41
      %s58 = sphi 0, %s42
      %s62 = sphi 0, %s62
      %s64 = sphi 0, %s62
      %s65 = sphi 0, %s64
      %s79 = sphi 0, %s65
      %s83 = sphi 0, %s83
      %s85 = sphi 0, %s83
      %s86 = sphi 0, %s85
      %s100 = sphi 0, %s86
      %s104 = sphi 0, %s104
      %s106 = sphi 0, %s104
      %s107 = sphi 0, %s106
      %s121 = sphi 0, %s107
      %s125 = sphi 0, %s125
      %s127 = sphi 0, %s125
      %s128 = sphi 0, %s127
      %s142 = sphi 0, %s128
      %s150 = sphi 0, %s152
      %s153 = sphi 0, %s150
      %s154 = sphi 0, %s153
      %s170 = sphi 0, %s154
    $region4: #{tpu_custom_call.1} parent=1 // loop_header_branch
      %17 = sbr.rel (%p15) target = $region8
    $region5: #{tpu_custom_call.1} parent=1 // loop_body
      %s19 = ssub.s32 %s14, 1
      %s20 = ssub.s32 %s14, 2
      %s27 = sadd.s32 1, %s22
      %p28 = scmp.ge.s32.totalorder %s27, 1
      %s29 = scalar_select %p28, 0, %s27
      %s30 = sadd.s32 1, %s21
      %s31 = scalar_select %p28, %s30, %s21
      %p32 = scmp.ge.s32.totalorder %s31, 2
      %s33 = scalar_select %p32, 0, %s31
      %s34 = ssub.s32 %s21, %s33
      %s35 = ssub.s32 %s22, %s29
      %s36 = sor.u32 %s34, %s35
      %p37 = scmp.eq.s32.totalorder %s36, 0
      %s39 = sadd.s32 %s38, 1
      %s40 = scalar_select %p37, %s38, %s39
      %p43 = pneg %p37
      %p44 = scmp.eq.s32.totalorder %s14, 1
      %p45 = por %p43, %p44
      %p46 = scmp.ne.s32.totalorder %s38, %s41
      %p47 = scmp.eq.s32.totalorder %s14, 0
      %p48 = por %p46, %p47
      %p49 = scmp.ne.s32.totalorder %s38, %s41
      %p50 = scmp.eq.s32.totalorder %s19, 1
      %p51 = por %p49, %p50
      %p52 = scmp.ne.s32.totalorder %s41, %s42
      %p53 = scmp.eq.s32.totalorder %s19, 0
      %p54 = por %p52, %p53
      %p55 = scmp.ne.s32.totalorder %s41, %s42
      %p56 = scmp.eq.s32.totalorder %s20, 1
      %p57 = por %p55, %p56
      %p59 = scmp.ne.s32.totalorder %s42, %s58
      %p60 = scmp.eq.s32.totalorder %s20, 0
      %p61 = por %p59, %p60
      %s63 = sadd.s32 %s62, 1
      %p66 = scmp.eq.s32.totalorder %s14, 1
      %p67 = scmp.ne.s32.totalorder %s62, %s64
      %p68 = scmp.eq.s32.totalorder %s14, 0
      %p69 = por %p67, %p68
      %p70 = scmp.ne.s32.totalorder %s62, %s64
      %p71 = scmp.eq.s32.totalorder %s19, 1
      %p72 = por %p70, %p71
      %p73 = scmp.ne.s32.totalorder %s64, %s65
      %p74 = scmp.eq.s32.totalorder %s19, 0
      %p75 = por %p73, %p74
      %p76 = scmp.ne.s32.totalorder %s64, %s65
      %p77 = scmp.eq.s32.totalorder %s20, 1
      %p78 = por %p76, %p77
      %p80 = scmp.ne.s32.totalorder %s65, %s79
      %p81 = scmp.eq.s32.totalorder %s20, 0
      %p82 = por %p80, %p81
      %s84 = sadd.s32 %s83, 1
      %p87 = scmp.eq.s32.totalorder %s14, 1
      %p88 = scmp.ne.s32.totalorder %s83, %s85
      %p89 = scmp.eq.s32.totalorder %s14, 0
      %p90 = por %p88, %p89
      %p91 = scmp.ne.s32.totalorder %s83, %s85
      %p92 = scmp.eq.s32.totalorder %s19, 1
      %p93 = por %p91, %p92
      %p94 = scmp.ne.s32.totalorder %s85, %s86
      %p95 = scmp.eq.s32.totalorder %s19, 0
      %p96 = por %p94, %p95
      %p97 = scmp.ne.s32.totalorder %s85, %s86
      %p98 = scmp.eq.s32.totalorder %s20, 1
      %p99 = por %p97, %p98
      %p101 = scmp.ne.s32.totalorder %s86, %s100
      %p102 = scmp.eq.s32.totalorder %s20, 0
      %p103 = por %p101, %p102
      %s105 = sadd.s32 %s104, 1
      %p108 = scmp.eq.s32.totalorder %s14, 1
      %p109 = scmp.ne.s32.totalorder %s104, %s106
      %p110 = scmp.eq.s32.totalorder %s14, 0
      %p111 = por %p109, %p110
      %p112 = scmp.ne.s32.totalorder %s104, %s106
      %p113 = scmp.eq.s32.totalorder %s19, 1
      %p114 = por %p112, %p113
      %p115 = scmp.ne.s32.totalorder %s106, %s107
      %p116 = scmp.eq.s32.totalorder %s19, 0
      %p117 = por %p115, %p116
      %p118 = scmp.ne.s32.totalorder %s106, %s107
      %p119 = scmp.eq.s32.totalorder %s20, 1
      %p120 = por %p118, %p119
      %p122 = scmp.ne.s32.totalorder %s107, %s121
      %p123 = scmp.eq.s32.totalorder %s20, 0
      %p124 = por %p122, %p123
      %s126 = sadd.s32 %s125, 1
      %p129 = scmp.eq.s32.totalorder %s14, 1
      %p130 = scmp.ne.s32.totalorder %s125, %s127
      %p131 = scmp.eq.s32.totalorder %s14, 0
      %p132 = por %p130, %p131
      %p133 = scmp.ne.s32.totalorder %s125, %s127
      %p134 = scmp.eq.s32.totalorder %s19, 1
      %p135 = por %p133, %p134
      %p136 = scmp.ne.s32.totalorder %s127, %s128
      %p137 = scmp.eq.s32.totalorder %s19, 0
      %p138 = por %p136, %p137
      %p139 = scmp.ne.s32.totalorder %s127, %s128
      %p140 = scmp.eq.s32.totalorder %s20, 1
      %p141 = por %p139, %p140
      %p143 = scmp.ne.s32.totalorder %s128, %s142
      %p144 = scmp.eq.s32.totalorder %s20, 0
      %p145 = por %p143, %p144
      %s146 = ssub.s32 %s21, %s33
      %s147 = ssub.s32 %s22, %s29
      %s148 = sor.u32 %s146, %s147
      %p149 = scmp.eq.s32.totalorder %s148, 0
      %s151 = sadd.s32 %s150, 1
      %s152 = scalar_select %p149, %s150, %s151
      %p155 = pneg %p149
      %p156 = scmp.eq.s32.totalorder %s14, 1
      %p157 = por %p155, %p156
      %p158 = scmp.ne.s32.totalorder %s150, %s153
      %p159 = scmp.eq.s32.totalorder %s14, 0
      %p160 = por %p158, %p159
      %p161 = scmp.ne.s32.totalorder %s150, %s153
      %p162 = scmp.eq.s32.totalorder %s19, 1
      %p163 = por %p161, %p162
      %p164 = scmp.ne.s32.totalorder %s153, %s154
      %p165 = scmp.eq.s32.totalorder %s19, 0
      %p166 = por %p164, %p165
      %p167 = scmp.ne.s32.totalorder %s153, %s154
      %p168 = scmp.eq.s32.totalorder %s20, 1
      %p169 = por %p167, %p168
      %p171 = scmp.ne.s32.totalorder %s154, %s170
      %p172 = scmp.eq.s32.totalorder %s20, 0
      %p173 = por %p171, %p172
      %p174 = scmp.le.s32.totalorder 1, %s14
      %p175 = scmp.lt.s32.totalorder %s14, 3
      %p176 = pnand %p174, %p175
      %p177 = pneg %p176
      // Predicated region
      $region9: #{tpu_custom_call.1} parent=5 // pred_check
        _
      $region10: #{tpu_custom_call.1} parent=5 // pred_check_branch
        %179 = sbr.rel (%p176) target = $region12
      $region11: #{tpu_custom_call.1} parent=5 // pred_region
        %s180 = ssub.s32 %s14, 1
        // Predicated region
        $region13: #{tpu_custom_call.1} parent=11 // pred_check
          %p181 = pneg %p75
        $region14: #{tpu_custom_call.1} parent=11 // pred_check_branch
          %183 = sbr.rel (%p181) target = $region16
        $region15: #{tpu_custom_call.1} parent=11 // pred_region
          _
        $region16: #{tpu_custom_call.1} parent=11 // pred_fallthru
          _
        // Predicated region
        $region17: #{tpu_custom_call.1} parent=11 // pred_check
          %p184 = pneg %p96
        $region18: #{tpu_custom_call.1} parent=11 // pred_check_branch
          %186 = sbr.rel (%p184) target = $region20
        $region19: #{tpu_custom_call.1} parent=11 // pred_region
          _
        $region20: #{tpu_custom_call.1} parent=11 // pred_fallthru
          _
        // Predicated region
        $region21: #{tpu_custom_call.1} parent=11 // pred_check
          %p187 = pneg %p117
        $region22: #{tpu_custom_call.1} parent=11 // pred_check_branch
          %189 = sbr.rel (%p187) target = $region24
        $region23: #{tpu_custom_call.1} parent=11 // pred_region
          _
        $region24: #{tpu_custom_call.1} parent=11 // pred_fallthru
          _
        // Predicated region
        $region25: #{tpu_custom_call.1} parent=11 // pred_check
          %p190 = pneg %p138
        $region26: #{tpu_custom_call.1} parent=11 // pred_check_branch
          %192 = sbr.rel (%p190) target = $region28
        $region27: #{tpu_custom_call.1} parent=11 // pred_region
          _
        $region28: #{tpu_custom_call.1} parent=11 // pred_fallthru
          _
      $region12: #{tpu_custom_call.1} parent=5 // pred_fallthru
        _
      %p193 = scmp.lt.s32.totalorder %s14, 2
      // Predicated region
      $region29: #{tpu_custom_call.1} parent=5 // pred_check
        %p194 = pneg %p193
      $region30: #{tpu_custom_call.1} parent=5 // pred_check_branch
        %196 = sbr.rel (%p194) target = $region32
      $region31: #{tpu_custom_call.1} parent=5 // pred_region
        // Predicated region
        $region33: #{tpu_custom_call.1} parent=31 // pred_check
          %p197 = pneg %p48
        $region34: #{tpu_custom_call.1} parent=31 // pred_check_branch
          %199 = sbr.rel (%p197) target = $region36
        $region35: #{tpu_custom_call.1} parent=31 // pred_region
          %s200 = smul.u32 2, %s22
          %p201 = scmp.lt.s32.totalorder %s21, 1
          %s202 = scalar_select %p201, %s21, 1
          %p203 = scmp.lt.s32.totalorder %s200, 1
          %s204 = scalar_select %p203, %s200, 1
          %s205 = smul.addr %s202, 2
          %s206 = sadd.s32 %s204, %s205
          %s207 = smul.addr %s206, 4
          %s208 = scalar_lea.vmem %s0, %s207
          %s209 = smul.u32 2, %s22
        $region36: #{tpu_custom_call.1} parent=31 // pred_fallthru
          _
      $region32: #{tpu_custom_call.1} parent=5 // pred_fallthru
        _
      %p210 = scmp.le.s32.totalorder 1, %s14
      %p211 = scmp.lt.s32.totalorder %s14, 3
      %p212 = pnand %p210, %p211
      %p213 = pneg %p212
      // Predicated region
      $region37: #{tpu_custom_call.1} parent=5 // pred_check
        _
      $region38: #{tpu_custom_call.1} parent=5 // pred_check_branch
        %215 = sbr.rel (%p212) target = $region40
      $region39: #{tpu_custom_call.1} parent=5 // pred_region
        %s216 = ssub.s32 %s14, 1
        %s217 = smul.u32 2, %s24
        %p218 = scmp.lt.s32.totalorder %s23, 1
        %s219 = scalar_select %p218, %s23, 1
        %p220 = scmp.lt.s32.totalorder %s217, 1
        %s221 = scalar_select %p220, %s217, 1
        %s222 = smul.addr %s219, 2
        %s223 = sadd.s32 %s221, %s222
        %s224 = smul.addr %s223, 4
        %s225 = scalar_lea.vmem %s0, %s224
        %p226 = pneg %p54
        %p227 = pneg %p51
        %p228 = pneg %p75
        %p229 = pneg %p72
        %p230 = pneg %p96
        %p231 = pneg %p93
        %p232 = pneg %p117
        %p233 = pneg %p114
        %p234 = pneg %p138
        %p235 = pneg %p135
        %p236 = pneg %p166
        %p237 = pneg %p163
        %s238 = sand.u32 %s153, 1
        %s239 = scalar_lea.sflag [#allocation3], %s238
        %s240 = sand.u32 %s153, 1
        %s241 = smul.addr %s240, 16
        %s242 = scalar_lea.vmem [#allocation2], %s241
        %s243 = smul.u32 2, %s24
        %p244 = scmp.lt.s32.totalorder %s23, 1
        %s245 = scalar_select %p244, %s23, 1
        %p246 = scmp.lt.s32.totalorder %s243, 1
        %s247 = scalar_select %p246, %s243, 1
        %s248 = smul.addr %s245, 2
        %s249 = sadd.s32 %s247, %s248
        %s250 = smul.addr %s249, 4
        %s251 = scalar_lea.vmem %s0, %s250
        %s252 = smul.u32 2, %s24
        %s253 = smul.u32 2, %s24
        %v254 = vld [vmem:[%s251] sm:$0xff]
        %v255 = vmax.f32 %v254, 0.0
        %v256 = vld [vmem:[%s1] sm:$0xff]
        %v257 = vld [vmem:[%s1 + $0x8] sm:$0xff]
        %v258 = vld [vmem:[%s1 + $0x10] sm:$0xff]
        %v259 = vld [vmem:[%s1 + $0x18] sm:$0xff]
        %v260 = vld [vmem:[%s1 + $0x20] sm:$0xff]
        %v261 = vld [vmem:[%s1 + $0x28] sm:$0xff]
        %v262 = vld [vmem:[%s1 + $0x30] sm:$0xff]
        %v263 = vld [vmem:[%s1 + $0x38] sm:$0xff]
        %v264 = vld [vmem:[%s1 + $0x40] sm:$0xff]
        %v265 = vld [vmem:[%s1 + $0x48] sm:$0xff]
        %v266 = vld [vmem:[%s1 + $0x50] sm:$0xff]
        %v267 = vld [vmem:[%s1 + $0x58] sm:$0xff]
        %v268 = vld [vmem:[%s1 + $0x60] sm:$0xff]
        %v269 = vld [vmem:[%s1 + $0x68] sm:$0xff]
        %v270 = vld [vmem:[%s1 + $0x70] sm:$0xff]
        %v271 = vld [vmem:[%s1 + $0x78] sm:$0xff]
        %v272 = vld [vmem:[%s1 + $0x80] sm:$0xff]
        %v273 = vld [vmem:[%s1 + $0x88] sm:$0xff]
        %v274 = vld [vmem:[%s1 + $0x90] sm:$0xff]
        %v275 = vld [vmem:[%s1 + $0x98] sm:$0xff]
        %v276 = vld [vmem:[%s1 + $0xa0] sm:$0xff]
        %v277 = vld [vmem:[%s1 + $0xa8] sm:$0xff]
        %v278 = vld [vmem:[%s1 + $0xb0] sm:$0xff]
        %v279 = vld [vmem:[%s1 + $0xb8] sm:$0xff]
        %v280 = vld [vmem:[%s1 + $0xc0] sm:$0xff]
        %v281 = vld [vmem:[%s1 + $0xc8] sm:$0xff]
        %v282 = vld [vmem:[%s1 + $0xd0] sm:$0xff]
        %v283 = vld [vmem:[%s1 + $0xd8] sm:$0xff]
        %v284 = vld [vmem:[%s1 + $0xe0] sm:$0xff]
        %v285 = vld [vmem:[%s1 + $0xe8] sm:$0xff]
        %v286 = vld [vmem:[%s1 + $0xf0] sm:$0xff]
        %v287 = vld [vmem:[%s1 + $0xf8] sm:$0xff]
        %v288 = vld [vmem:[%s1 + $0x100] sm:$0xff]
        %v289 = vld [vmem:[%s1 + $0x108] sm:$0xff]
        %v290 = vld [vmem:[%s1 + $0x110] sm:$0xff]
        %v291 = vld [vmem:[%s1 + $0x118] sm:$0xff]
        %v292 = vld [vmem:[%s1 + $0x120] sm:$0xff]
        %v293 = vld [vmem:[%s1 + $0x128] sm:$0xff]
        %v294 = vld [vmem:[%s1 + $0x130] sm:$0xff]
        %v295 = vld [vmem:[%s1 + $0x138] sm:$0xff]
        %v296 = vld [vmem:[%s1 + $0x140] sm:$0xff]
        %v297 = vld [vmem:[%s1 + $0x148] sm:$0xff]
        %v298 = vld [vmem:[%s1 + $0x150] sm:$0xff]
        %v299 = vld [vmem:[%s1 + $0x158] sm:$0xff]
        %v300 = vld [vmem:[%s1 + $0x160] sm:$0xff]
        %v301 = vld [vmem:[%s1 + $0x168] sm:$0xff]
        %v302 = vld [vmem:[%s1 + $0x170] sm:$0xff]
        %v303 = vld [vmem:[%s1 + $0x178] sm:$0xff]
        %v304 = vld [vmem:[%s1 + $0x180] sm:$0xff]
        %v305 = vld [vmem:[%s1 + $0x188] sm:$0xff]
        %v306 = vld [vmem:[%s1 + $0x190] sm:$0xff]
        %v307 = vld [vmem:[%s1 + $0x198] sm:$0xff]
        %v308 = vld [vmem:[%s1 + $0x1a0] sm:$0xff]
        %v309 = vld [vmem:[%s1 + $0x1a8] sm:$0xff]
        %v310 = vld [vmem:[%s1 + $0x1b0] sm:$0xff]
        %v311 = vld [vmem:[%s1 + $0x1b8] sm:$0xff]
        %v312 = vld [vmem:[%s1 + $0x1c0] sm:$0xff]
        %v313 = vld [vmem:[%s1 + $0x1c8] sm:$0xff]
        %v314 = vld [vmem:[%s1 + $0x1d0] sm:$0xff]
        %v315 = vld [vmem:[%s1 + $0x1d8] sm:$0xff]
        %v316 = vld [vmem:[%s1 + $0x1e0] sm:$0xff]
        %v317 = vld [vmem:[%s1 + $0x1e8] sm:$0xff]
        %v318 = vld [vmem:[%s1 + $0x1f0] sm:$0xff]
        %v319 = vld [vmem:[%s1 + $0x1f8] sm:$0xff]
        %321 = vset.pattern.permute.xlu0 0
        %322 = vperm.xlu0 %321, %v256
        %v323 = vpop.permute.xlu0 %322
        %326 = vset.pattern.permute.xlu0 0
        %327 = vperm.xlu0 %326, %v257
        %v328 = vpop.permute.xlu0 %327
        %331 = vset.pattern.permute.xlu0 0
        %332 = vperm.xlu0 %331, %v258
        %v333 = vpop.permute.xlu0 %332
        %336 = vset.pattern.permute.xlu0 0
        %337 = vperm.xlu0 %336, %v259
        %v338 = vpop.permute.xlu0 %337
        %341 = vset.pattern.permute.xlu0 0
        %342 = vperm.xlu0 %341, %v260
        %v343 = vpop.permute.xlu0 %342
        %346 = vset.pattern.permute.xlu0 0
        %347 = vperm.xlu0 %346, %v261
        %v348 = vpop.permute.xlu0 %347
        %351 = vset.pattern.permute.xlu0 0
        %352 = vperm.xlu0 %351, %v262
        %v353 = vpop.permute.xlu0 %352
        %356 = vset.pattern.permute.xlu0 0
        %357 = vperm.xlu0 %356, %v263
        %v358 = vpop.permute.xlu0 %357
        %361 = vset.pattern.permute.xlu0 0
        %362 = vperm.xlu0 %361, %v264
        %v363 = vpop.permute.xlu0 %362
        %366 = vset.pattern.permute.xlu0 0
        %367 = vperm.xlu0 %366, %v265
        %v368 = vpop.permute.xlu0 %367
        %371 = vset.pattern.permute.xlu0 0
        %372 = vperm.xlu0 %371, %v266
        %v373 = vpop.permute.xlu0 %372
        %376 = vset.pattern.permute.xlu0 0
        %377 = vperm.xlu0 %376, %v267
        %v378 = vpop.permute.xlu0 %377
        %381 = vset.pattern.permute.xlu0 0
        %382 = vperm.xlu0 %381, %v268
        %v383 = vpop.permute.xlu0 %382
        %386 = vset.pattern.permute.xlu0 0
        %387 = vperm.xlu0 %386, %v269
        %v388 = vpop.permute.xlu0 %387
        %391 = vset.pattern.permute.xlu0 0
        %392 = vperm.xlu0 %391, %v270
        %v393 = vpop.permute.xlu0 %392
        %396 = vset.pattern.permute.xlu0 0
        %397 = vperm.xlu0 %396, %v271
        %v398 = vpop.permute.xlu0 %397
        %401 = vset.pattern.permute.xlu0 0
        %402 = vperm.xlu0 %401, %v272
        %v403 = vpop.permute.xlu0 %402
        %406 = vset.pattern.permute.xlu0 0
        %407 = vperm.xlu0 %406, %v273
        %v408 = vpop.permute.xlu0 %407
        %411 = vset.pattern.permute.xlu0 0
        %412 = vperm.xlu0 %411, %v274
        %v413 = vpop.permute.xlu0 %412
        %416 = vset.pattern.permute.xlu0 0
        %417 = vperm.xlu0 %416, %v275
        %v418 = vpop.permute.xlu0 %417
        %421 = vset.pattern.permute.xlu0 0
        %422 = vperm.xlu0 %421, %v276
        %v423 = vpop.permute.xlu0 %422
        %426 = vset.pattern.permute.xlu0 0
        %427 = vperm.xlu0 %426, %v277
        %v428 = vpop.permute.xlu0 %427
        %431 = vset.pattern.permute.xlu0 0
        %432 = vperm.xlu0 %431, %v278
        %v433 = vpop.permute.xlu0 %432
        %436 = vset.pattern.permute.xlu0 0
        %437 = vperm.xlu0 %436, %v279
        %v438 = vpop.permute.xlu0 %437
        %441 = vset.pattern.permute.xlu0 0
        %442 = vperm.xlu0 %441, %v280
        %v443 = vpop.permute.xlu0 %442
        %446 = vset.pattern.permute.xlu0 0
        %447 = vperm.xlu0 %446, %v281
        %v448 = vpop.permute.xlu0 %447
        %451 = vset.pattern.permute.xlu0 0
        %452 = vperm.xlu0 %451, %v282
        %v453 = vpop.permute.xlu0 %452
        %456 = vset.pattern.permute.xlu0 0
        %457 = vperm.xlu0 %456, %v283
        %v458 = vpop.permute.xlu0 %457
        %461 = vset.pattern.permute.xlu0 0
        %462 = vperm.xlu0 %461, %v284
        %v463 = vpop.permute.xlu0 %462
        %466 = vset.pattern.permute.xlu0 0
        %467 = vperm.xlu0 %466, %v285
        %v468 = vpop.permute.xlu0 %467
        %471 = vset.pattern.permute.xlu0 0
        %472 = vperm.xlu0 %471, %v286
        %v473 = vpop.permute.xlu0 %472
        %476 = vset.pattern.permute.xlu0 0
        %477 = vperm.xlu0 %476, %v287
        %v478 = vpop.permute.xlu0 %477
        %481 = vset.pattern.permute.xlu0 0
        %482 = vperm.xlu0 %481, %v288
        %v483 = vpop.permute.xlu0 %482
        %486 = vset.pattern.permute.xlu0 0
        %487 = vperm.xlu0 %486, %v289
        %v488 = vpop.permute.xlu0 %487
        %491 = vset.pattern.permute.xlu0 0
        %492 = vperm.xlu0 %491, %v290
        %v493 = vpop.permute.xlu0 %492
        %496 = vset.pattern.permute.xlu0 0
        %497 = vperm.xlu0 %496, %v291
        %v498 = vpop.permute.xlu0 %497
        %501 = vset.pattern.permute.xlu0 0
        %502 = vperm.xlu0 %501, %v292
        %v503 = vpop.permute.xlu0 %502
        %506 = vset.pattern.permute.xlu0 0
        %507 = vperm.xlu0 %506, %v293
        %v508 = vpop.permute.xlu0 %507
        %511 = vset.pattern.permute.xlu0 0
        %512 = vperm.xlu0 %511, %v294
        %v513 = vpop.permute.xlu0 %512
        %516 = vset.pattern.permute.xlu0 0
        %517 = vperm.xlu0 %516, %v295
        %v518 = vpop.permute.xlu0 %517
        %521 = vset.pattern.permute.xlu0 0
        %522 = vperm.xlu0 %521, %v296
        %v523 = vpop.permute.xlu0 %522
        %526 = vset.pattern.permute.xlu0 0
        %527 = vperm.xlu0 %526, %v297
        %v528 = vpop.permute.xlu0 %527
        %531 = vset.pattern.permute.xlu0 0
        %532 = vperm.xlu0 %531, %v298
        %v533 = vpop.permute.xlu0 %532
        %536 = vset.pattern.permute.xlu0 0
        %537 = vperm.xlu0 %536, %v299
        %v538 = vpop.permute.xlu0 %537
        %541 = vset.pattern.permute.xlu0 0
        %542 = vperm.xlu0 %541, %v300
        %v543 = vpop.permute.xlu0 %542
        %546 = vset.pattern.permute.xlu0 0
        %547 = vperm.xlu0 %546, %v301
        %v548 = vpop.permute.xlu0 %547
        %551 = vset.pattern.permute.xlu0 0
        %552 = vperm.xlu0 %551, %v302
        %v553 = vpop.permute.xlu0 %552
        %556 = vset.pattern.permute.xlu0 0
        %557 = vperm.xlu0 %556, %v303
        %v558 = vpop.permute.xlu0 %557
        %561 = vset.pattern.permute.xlu0 0
        %562 = vperm.xlu0 %561, %v304
        %v563 = vpop.permute.xlu0 %562
        %566 = vset.pattern.permute.xlu0 0
        %567 = vperm.xlu0 %566, %v305
        %v568 = vpop.permute.xlu0 %567
        %571 = vset.pattern.permute.xlu0 0
        %572 = vperm.xlu0 %571, %v306
        %v573 = vpop.permute.xlu0 %572
        %576 = vset.pattern.permute.xlu0 0
        %577 = vperm.xlu0 %576, %v307
        %v578 = vpop.permute.xlu0 %577
        %581 = vset.pattern.permute.xlu0 0
        %582 = vperm.xlu0 %581, %v308
        %v583 = vpop.permute.xlu0 %582
        %586 = vset.pattern.permute.xlu0 0
        %587 = vperm.xlu0 %586, %v309
        %v588 = vpop.permute.xlu0 %587
        %591 = vset.pattern.permute.xlu0 0
        %592 = vperm.xlu0 %591, %v310
        %v593 = vpop.permute.xlu0 %592
        %596 = vset.pattern.permute.xlu0 0
        %597 = vperm.xlu0 %596, %v311
        %v598 = vpop.permute.xlu0 %597
        %601 = vset.pattern.permute.xlu0 0
        %602 = vperm.xlu0 %601, %v312
        %v603 = vpop.permute.xlu0 %602
        %606 = vset.pattern.permute.xlu0 0
        %607 = vperm.xlu0 %606, %v313
        %v608 = vpop.permute.xlu0 %607
        %611 = vset.pattern.permute.xlu0 0
        %612 = vperm.xlu0 %611, %v314
        %v613 = vpop.permute.xlu0 %612
        %616 = vset.pattern.permute.xlu0 0
        %617 = vperm.xlu0 %616, %v315
        %v618 = vpop.permute.xlu0 %617
        %621 = vset.pattern.permute.xlu0 0
        %622 = vperm.xlu0 %621, %v316
        %v623 = vpop.permute.xlu0 %622
        %626 = vset.pattern.permute.xlu0 0
        %627 = vperm.xlu0 %626, %v317
        %v628 = vpop.permute.xlu0 %627
        %631 = vset.pattern.permute.xlu0 0
        %632 = vperm.xlu0 %631, %v318
        %v633 = vpop.permute.xlu0 %632
        %636 = vset.pattern.permute.xlu0 0
        %637 = vperm.xlu0 %636, %v319
        %v638 = vpop.permute.xlu0 %637
        %v641 = vlaneseq
        %v642 = vshrl.u32 %v641, 7
        %v643 = vsub.s32 0, %v642
        %v644 = vrot.slane %v255, %v643
        %v645 = vlaneseq
        %v646 = vshrl.u32 %v645, 7
        %v647 = vsub.s32 4, %v646
        %v648 = vrot.slane %v255, %v647
        %v651 = vlaneseq
        %v652 = vshrl.u32 %v651, 7
        %v653 = vsub.s32 0, %v652
        %v654 = vrot.slane %v644, %v653
        %v655 = vlaneseq
        %v656 = vshrl.u32 %v655, 7
        %v657 = vsub.s32 0, %v656
        %v658 = vrot.slane %v648, %v657
        %v659 = vmul.f32 %v323, %v654
        %v660 = vmul.f32 %v323, %v658
        %v661 = vmul.f32 %v328, %v654
        %v662 = vmul.f32 %v328, %v658
        %v663 = vmul.f32 %v333, %v654
        %v664 = vmul.f32 %v333, %v658
        %v665 = vmul.f32 %v338, %v654
        %v666 = vmul.f32 %v338, %v658
        %v667 = vmul.f32 %v343, %v654
        %v668 = vmul.f32 %v343, %v658
        %v669 = vmul.f32 %v348, %v654
        %v670 = vmul.f32 %v348, %v658
        %v671 = vmul.f32 %v353, %v654
        %v672 = vmul.f32 %v353, %v658
        %v673 = vmul.f32 %v358, %v654
        %v674 = vmul.f32 %v358, %v658
        %v675 = vmul.f32 %v363, %v654
        %v676 = vmul.f32 %v363, %v658
        %v677 = vmul.f32 %v368, %v654
        %v678 = vmul.f32 %v368, %v658
        %v679 = vmul.f32 %v373, %v654
        %v680 = vmul.f32 %v373, %v658
        %v681 = vmul.f32 %v378, %v654
        %v682 = vmul.f32 %v378, %v658
        %v683 = vmul.f32 %v383, %v654
        %v684 = vmul.f32 %v383, %v658
        %v685 = vmul.f32 %v388, %v654
        %v686 = vmul.f32 %v388, %v658
        %v687 = vmul.f32 %v393, %v654
        %v688 = vmul.f32 %v393, %v658
        %v689 = vmul.f32 %v398, %v654
        %v690 = vmul.f32 %v398, %v658
        %v691 = vmul.f32 %v403, %v654
        %v692 = vmul.f32 %v403, %v658
        %v693 = vmul.f32 %v408, %v654
        %v694 = vmul.f32 %v408, %v658
        %v695 = vmul.f32 %v413, %v654
        %v696 = vmul.f32 %v413, %v658
        %v697 = vmul.f32 %v418, %v654
        %v698 = vmul.f32 %v418, %v658
        %v699 = vmul.f32 %v423, %v654
        %v700 = vmul.f32 %v423, %v658
        %v701 = vmul.f32 %v428, %v654
        %v702 = vmul.f32 %v428, %v658
        %v703 = vmul.f32 %v433, %v654
        %v704 = vmul.f32 %v433, %v658
        %v705 = vmul.f32 %v438, %v654
        %v706 = vmul.f32 %v438, %v658
        %v707 = vmul.f32 %v443, %v654
        %v708 = vmul.f32 %v443, %v658
        %v709 = vmul.f32 %v448, %v654
        %v710 = vmul.f32 %v448, %v658
        %v711 = vmul.f32 %v453, %v654
        %v712 = vmul.f32 %v453, %v658
        %v713 = vmul.f32 %v458, %v654
        %v714 = vmul.f32 %v458, %v658
        %v715 = vmul.f32 %v463, %v654
        %v716 = vmul.f32 %v463, %v658
        %v717 = vmul.f32 %v468, %v654
        %v718 = vmul.f32 %v468, %v658
        %v719 = vmul.f32 %v473, %v654
        %v720 = vmul.f32 %v473, %v658
        %v721 = vmul.f32 %v478, %v654
        %v722 = vmul.f32 %v478, %v658
        %v723 = vmul.f32 %v483, %v654
        %v724 = vmul.f32 %v483, %v658
        %v725 = vmul.f32 %v488, %v654
        %v726 = vmul.f32 %v488, %v658
        %v727 = vmul.f32 %v493, %v654
        %v728 = vmul.f32 %v493, %v658
        %v729 = vmul.f32 %v498, %v654
        %v730 = vmul.f32 %v498, %v658
        %v731 = vmul.f32 %v503, %v654
        %v732 = vmul.f32 %v503, %v658
        %v733 = vmul.f32 %v508, %v654
        %v734 = vmul.f32 %v508, %v658
        %v735 = vmul.f32 %v513, %v654
        %v736 = vmul.f32 %v513, %v658
        %v737 = vmul.f32 %v518, %v654
        %v738 = vmul.f32 %v518, %v658
        %v739 = vmul.f32 %v523, %v654
        %v740 = vmul.f32 %v523, %v658
        %v741 = vmul.f32 %v528, %v654
        %v742 = vmul.f32 %v528, %v658
        %v743 = vmul.f32 %v533, %v654
        %v744 = vmul.f32 %v533, %v658
        %v745 = vmul.f32 %v538, %v654
        %v746 = vmul.f32 %v538, %v658
        %v747 = vmul.f32 %v543, %v654
        %v748 = vmul.f32 %v543, %v658
        %v749 = vmul.f32 %v548, %v654
        %v750 = vmul.f32 %v548, %v658
        %v751 = vmul.f32 %v553, %v654
        %v752 = vmul.f32 %v553, %v658
        %v753 = vmul.f32 %v558, %v654
        %v754 = vmul.f32 %v558, %v658
        %v755 = vmul.f32 %v563, %v654
        %v756 = vmul.f32 %v563, %v658
        %v757 = vmul.f32 %v568, %v654
        %v758 = vmul.f32 %v568, %v658
        %v759 = vmul.f32 %v573, %v654
        %v760 = vmul.f32 %v573, %v658
        %v761 = vmul.f32 %v578, %v654
        %v762 = vmul.f32 %v578, %v658
        %v763 = vmul.f32 %v583, %v654
        %v764 = vmul.f32 %v583, %v658
        %v765 = vmul.f32 %v588, %v654
        %v766 = vmul.f32 %v588, %v658
        %v767 = vmul.f32 %v593, %v654
        %v768 = vmul.f32 %v593, %v658
        %v769 = vmul.f32 %v598, %v654
        %v770 = vmul.f32 %v598, %v658
        %v771 = vmul.f32 %v603, %v654
        %v772 = vmul.f32 %v603, %v658
        %v773 = vmul.f32 %v608, %v654
        %v774 = vmul.f32 %v608, %v658
        %v775 = vmul.f32 %v613, %v654
        %v776 = vmul.f32 %v613, %v658
        %v777 = vmul.f32 %v618, %v654
        %v778 = vmul.f32 %v618, %v658
        %v779 = vmul.f32 %v623, %v654
        %v780 = vmul.f32 %v623, %v658
        %v781 = vmul.f32 %v628, %v654
        %v782 = vmul.f32 %v628, %v658
        %v783 = vmul.f32 %v633, %v654
        %v784 = vmul.f32 %v633, %v658
        %v785 = vmul.f32 %v638, %v654
        %v786 = vmul.f32 %v638, %v658
        %787 = vset.pattern.permute.xlu0 1
        %788 = vperm.xlu0 %787, %v256
        %v789 = vpop.permute.xlu0 %788
        %791 = vset.pattern.permute.xlu0 1
        %792 = vperm.xlu0 %791, %v257
        %v793 = vpop.permute.xlu0 %792
        %795 = vset.pattern.permute.xlu0 1
        %796 = vperm.xlu0 %795, %v258
        %v797 = vpop.permute.xlu0 %796
        %799 = vset.pattern.permute.xlu0 1
        %800 = vperm.xlu0 %799, %v259
        %v801 = vpop.permute.xlu0 %800
        %803 = vset.pattern.permute.xlu0 1
        %804 = vperm.xlu0 %803, %v260
        %v805 = vpop.permute.xlu0 %804
        %807 = vset.pattern.permute.xlu0 1
        %808 = vperm.xlu0 %807, %v261
        %v809 = vpop.permute.xlu0 %808
        %811 = vset.pattern.permute.xlu0 1
        %812 = vperm.xlu0 %811, %v262
        %v813 = vpop.permute.xlu0 %812
        %815 = vset.pattern.permute.xlu0 1
        %816 = vperm.xlu0 %815, %v263
        %v817 = vpop.permute.xlu0 %816
        %819 = vset.pattern.permute.xlu0 1
        %820 = vperm.xlu0 %819, %v264
        %v821 = vpop.permute.xlu0 %820
        %823 = vset.pattern.permute.xlu0 1
        %824 = vperm.xlu0 %823, %v265
        %v825 = vpop.permute.xlu0 %824
        %827 = vset.pattern.permute.xlu0 1
        %828 = vperm.xlu0 %827, %v266
        %v829 = vpop.permute.xlu0 %828
        %831 = vset.pattern.permute.xlu0 1
        %832 = vperm.xlu0 %831, %v267
        %v833 = vpop.permute.xlu0 %832
        %835 = vset.pattern.permute.xlu0 1
        %836 = vperm.xlu0 %835, %v268
        %v837 = vpop.permute.xlu0 %836
        %839 = vset.pattern.permute.xlu0 1
        %840 = vperm.xlu0 %839, %v269
        %v841 = vpop.permute.xlu0 %840
        %843 = vset.pattern.permute.xlu0 1
        %844 = vperm.xlu0 %843, %v270
        %v845 = vpop.permute.xlu0 %844
        %847 = vset.pattern.permute.xlu0 1
        %848 = vperm.xlu0 %847, %v271
        %v849 = vpop.permute.xlu0 %848
        %851 = vset.pattern.permute.xlu0 1
        %852 = vperm.xlu0 %851, %v272
        %v853 = vpop.permute.xlu0 %852
        %855 = vset.pattern.permute.xlu0 1
        %856 = vperm.xlu0 %855, %v273
        %v857 = vpop.permute.xlu0 %856
        %859 = vset.pattern.permute.xlu0 1
        %860 = vperm.xlu0 %859, %v274
        %v861 = vpop.permute.xlu0 %860
        %863 = vset.pattern.permute.xlu0 1
        %864 = vperm.xlu0 %863, %v275
        %v865 = vpop.permute.xlu0 %864
        %867 = vset.pattern.permute.xlu0 1
        %868 = vperm.xlu0 %867, %v276
        %v869 = vpop.permute.xlu0 %868
        %871 = vset.pattern.permute.xlu0 1
        %872 = vperm.xlu0 %871, %v277
        %v873 = vpop.permute.xlu0 %872
        %875 = vset.pattern.permute.xlu0 1
        %876 = vperm.xlu0 %875, %v278
        %v877 = vpop.permute.xlu0 %876
        %879 = vset.pattern.permute.xlu0 1
        %880 = vperm.xlu0 %879, %v279
        %v881 = vpop.permute.xlu0 %880
        %883 = vset.pattern.permute.xlu0 1
        %884 = vperm.xlu0 %883, %v280
        %v885 = vpop.permute.xlu0 %884
        %887 = vset.pattern.permute.xlu0 1
        %888 = vperm.xlu0 %887, %v281
        %v889 = vpop.permute.xlu0 %888
        %891 = vset.pattern.permute.xlu0 1
        %892 = vperm.xlu0 %891, %v282
        %v893 = vpop.permute.xlu0 %892
        %895 = vset.pattern.permute.xlu0 1
        %896 = vperm.xlu0 %895, %v283
        %v897 = vpop.permute.xlu0 %896
        %899 = vset.pattern.permute.xlu0 1
        %900 = vperm.xlu0 %899, %v284
        %v901 = vpop.permute.xlu0 %900
        %903 = vset.pattern.permute.xlu0 1
        %904 = vperm.xlu0 %903, %v285
        %v905 = vpop.permute.xlu0 %904
        %907 = vset.pattern.permute.xlu0 1
        %908 = vperm.xlu0 %907, %v286
        %v909 = vpop.permute.xlu0 %908
        %911 = vset.pattern.permute.xlu0 1
        %912 = vperm.xlu0 %911, %v287
        %v913 = vpop.permute.xlu0 %912
        %915 = vset.pattern.permute.xlu0 1
        %916 = vperm.xlu0 %915, %v288
        %v917 = vpop.permute.xlu0 %916
        %919 = vset.pattern.permute.xlu0 1
        %920 = vperm.xlu0 %919, %v289
        %v921 = vpop.permute.xlu0 %920
        %923 = vset.pattern.permute.xlu0 1
        %924 = vperm.xlu0 %923, %v290
        %v925 = vpop.permute.xlu0 %924
        %927 = vset.pattern.permute.xlu0 1
        %928 = vperm.xlu0 %927, %v291
        %v929 = vpop.permute.xlu0 %928
        %931 = vset.pattern.permute.xlu0 1
        %932 = vperm.xlu0 %931, %v292
        %v933 = vpop.permute.xlu0 %932
        %935 = vset.pattern.permute.xlu0 1
        %936 = vperm.xlu0 %935, %v293
        %v937 = vpop.permute.xlu0 %936
        %939 = vset.pattern.permute.xlu0 1
        %940 = vperm.xlu0 %939, %v294
        %v941 = vpop.permute.xlu0 %940
        %943 = vset.pattern.permute.xlu0 1
        %944 = vperm.xlu0 %943, %v295
        %v945 = vpop.permute.xlu0 %944
        %947 = vset.pattern.permute.xlu0 1
        %948 = vperm.xlu0 %947, %v296
        %v949 = vpop.permute.xlu0 %948
        %951 = vset.pattern.permute.xlu0 1
        %952 = vperm.xlu0 %951, %v297
        %v953 = vpop.permute.xlu0 %952
        %955 = vset.pattern.permute.xlu0 1
        %956 = vperm.xlu0 %955, %v298
        %v957 = vpop.permute.xlu0 %956
        %959 = vset.pattern.permute.xlu0 1
        %960 = vperm.xlu0 %959, %v299
        %v961 = vpop.permute.xlu0 %960
        %963 = vset.pattern.permute.xlu0 1
        %964 = vperm.xlu0 %963, %v300
        %v965 = vpop.permute.xlu0 %964
        %967 = vset.pattern.permute.xlu0 1
        %968 = vperm.xlu0 %967, %v301
        %v969 = vpop.permute.xlu0 %968
        %971 = vset.pattern.permute.xlu0 1
        %972 = vperm.xlu0 %971, %v302
        %v973 = vpop.permute.xlu0 %972
        %975 = vset.pattern.permute.xlu0 1
        %976 = vperm.xlu0 %975, %v303
        %v977 = vpop.permute.xlu0 %976
        %979 = vset.pattern.permute.xlu0 1
        %980 = vperm.xlu0 %979, %v304
        %v981 = vpop.permute.xlu0 %980
        %983 = vset.pattern.permute.xlu0 1
        %984 = vperm.xlu0 %983, %v305
        %v985 = vpop.permute.xlu0 %984
        %987 = vset.pattern.permute.xlu0 1
        %988 = vperm.xlu0 %987, %v306
        %v989 = vpop.permute.xlu0 %988
        %991 = vset.pattern.permute.xlu0 1
        %992 = vperm.xlu0 %991, %v307
        %v993 = vpop.permute.xlu0 %992
        %995 = vset.pattern.permute.xlu0 1
        %996 = vperm.xlu0 %995, %v308
        %v997 = vpop.permute.xlu0 %996
        %999 = vset.pattern.permute.xlu0 1
        %1000 = vperm.xlu0 %999, %v309
        %v1001 = vpop.permute.xlu0 %1000
        %1003 = vset.pattern.permute.xlu0 1
        %1004 = vperm.xlu0 %1003, %v310
        %v1005 = vpop.permute.xlu0 %1004
        %1007 = vset.pattern.permute.xlu0 1
        %1008 = vperm.xlu0 %1007, %v311
        %v1009 = vpop.permute.xlu0 %1008
        %1011 = vset.pattern.permute.xlu0 1
        %1012 = vperm.xlu0 %1011, %v312
        %v1013 = vpop.permute.xlu0 %1012
        %1015 = vset.pattern.permute.xlu0 1
        %1016 = vperm.xlu0 %1015, %v313
        %v1017 = vpop.permute.xlu0 %1016
        %1019 = vset.pattern.permute.xlu0 1
        %1020 = vperm.xlu0 %1019, %v314
        %v1021 = vpop.permute.xlu0 %1020
        %1023 = vset.pattern.permute.xlu0 1
        %1024 = vperm.xlu0 %1023, %v315
        %v1025 = vpop.permute.xlu0 %1024
        %1027 = vset.pattern.permute.xlu0 1
        %1028 = vperm.xlu0 %1027, %v316
        %v1029 = vpop.permute.xlu0 %1028
        %1031 = vset.pattern.permute.xlu0 1
        %1032 = vperm.xlu0 %1031, %v317
        %v1033 = vpop.permute.xlu0 %1032
        %1035 = vset.pattern.permute.xlu0 1
        %1036 = vperm.xlu0 %1035, %v318
        %v1037 = vpop.permute.xlu0 %1036
        %1039 = vset.pattern.permute.xlu0 1
        %1040 = vperm.xlu0 %1039, %v319
        %v1041 = vpop.permute.xlu0 %1040
        %v1043 = vlaneseq
        %v1044 = vshrl.u32 %v1043, 7
        %v1045 = vsub.s32 1, %v1044
        %v1046 = vrot.slane %v255, %v1045
        %v1047 = vlaneseq
        %v1048 = vshrl.u32 %v1047, 7
        %v1049 = vsub.s32 5, %v1048
        %v1050 = vrot.slane %v255, %v1049
        %v1053 = vlaneseq
        %v1054 = vshrl.u32 %v1053, 7
        %v1055 = vsub.s32 1, %v1054
        %v1056 = vrot.slane %v1046, %v1055
        %v1057 = vlaneseq
        %v1058 = vshrl.u32 %v1057, 7
        %v1059 = vsub.s32 1, %v1058
        %v1060 = vrot.slane %v1050, %v1059
        %v1061 = vmul.f32 %v789, %v1056
        %v1062 = vmul.f32 %v789, %v1060
        %v1063 = vmul.f32 %v793, %v1056
        %v1064 = vmul.f32 %v793, %v1060
        %v1065 = vmul.f32 %v797, %v1056
        %v1066 = vmul.f32 %v797, %v1060
        %v1067 = vmul.f32 %v801, %v1056
        %v1068 = vmul.f32 %v801, %v1060
        %v1069 = vmul.f32 %v805, %v1056
        %v1070 = vmul.f32 %v805, %v1060
        %v1071 = vmul.f32 %v809, %v1056
        %v1072 = vmul.f32 %v809, %v1060
        %v1073 = vmul.f32 %v813, %v1056
        %v1074 = vmul.f32 %v813, %v1060
        %v1075 = vmul.f32 %v817, %v1056
        %v1076 = vmul.f32 %v817, %v1060
        %v1077 = vmul.f32 %v821, %v1056
        %v1078 = vmul.f32 %v821, %v1060
        %v1079 = vmul.f32 %v825, %v1056
        %v1080 = vmul.f32 %v825, %v1060
        %v1081 = vmul.f32 %v829, %v1056
        %v1082 = vmul.f32 %v829, %v1060
        %v1083 = vmul.f32 %v833, %v1056
        %v1084 = vmul.f32 %v833, %v1060
        %v1085 = vmul.f32 %v837, %v1056
        %v1086 = vmul.f32 %v837, %v1060
        %v1087 = vmul.f32 %v841, %v1056
        %v1088 = vmul.f32 %v841, %v1060
        %v1089 = vmul.f32 %v845, %v1056
        %v1090 = vmul.f32 %v845, %v1060
        %v1091 = vmul.f32 %v849, %v1056
        %v1092 = vmul.f32 %v849, %v1060
        %v1093 = vmul.f32 %v853, %v1056
        %v1094 = vmul.f32 %v853, %v1060
        %v1095 = vmul.f32 %v857, %v1056
        %v1096 = vmul.f32 %v857, %v1060
        %v1097 = vmul.f32 %v861, %v1056
        %v1098 = vmul.f32 %v861, %v1060
        %v1099 = vmul.f32 %v865, %v1056
        %v1100 = vmul.f32 %v865, %v1060
        %v1101 = vmul.f32 %v869, %v1056
        %v1102 = vmul.f32 %v869, %v1060
        %v1103 = vmul.f32 %v873, %v1056
        %v1104 = vmul.f32 %v873, %v1060
        %v1105 = vmul.f32 %v877, %v1056
        %v1106 = vmul.f32 %v877, %v1060
        %v1107 = vmul.f32 %v881, %v1056
        %v1108 = vmul.f32 %v881, %v1060
        %v1109 = vmul.f32 %v885, %v1056
        %v1110 = vmul.f32 %v885, %v1060
        %v1111 = vmul.f32 %v889, %v1056
        %v1112 = vmul.f32 %v889, %v1060
        %v1113 = vmul.f32 %v893, %v1056
        %v1114 = vmul.f32 %v893, %v1060
        %v1115 = vmul.f32 %v897, %v1056
        %v1116 = vmul.f32 %v897, %v1060
        %v1117 = vmul.f32 %v901, %v1056
        %v1118 = vmul.f32 %v901, %v1060
        %v1119 = vmul.f32 %v905, %v1056
        %v1120 = vmul.f32 %v905, %v1060
        %v1121 = vmul.f32 %v909, %v1056
        %v1122 = vmul.f32 %v909, %v1060
        %v1123 = vmul.f32 %v913, %v1056
        %v1124 = vmul.f32 %v913, %v1060
        %v1125 = vmul.f32 %v917, %v1056
        %v1126 = vmul.f32 %v917, %v1060
        %v1127 = vmul.f32 %v921, %v1056
        %v1128 = vmul.f32 %v921, %v1060
        %v1129 = vmul.f32 %v925, %v1056
        %v1130 = vmul.f32 %v925, %v1060
        %v1131 = vmul.f32 %v929, %v1056
        %v1132 = vmul.f32 %v929, %v1060
        %v1133 = vmul.f32 %v933, %v1056
        %v1134 = vmul.f32 %v933, %v1060
        %v1135 = vmul.f32 %v937, %v1056
        %v1136 = vmul.f32 %v937, %v1060
        %v1137 = vmul.f32 %v941, %v1056
        %v1138 = vmul.f32 %v941, %v1060
        %v1139 = vmul.f32 %v945, %v1056
        %v1140 = vmul.f32 %v945, %v1060
        %v1141 = vmul.f32 %v949, %v1056
        %v1142 = vmul.f32 %v949, %v1060
        %v1143 = vmul.f32 %v953, %v1056
        %v1144 = vmul.f32 %v953, %v1060
        %v1145 = vmul.f32 %v957, %v1056
        %v1146 = vmul.f32 %v957, %v1060
        %v1147 = vmul.f32 %v961, %v1056
        %v1148 = vmul.f32 %v961, %v1060
        %v1149 = vmul.f32 %v965, %v1056
        %v1150 = vmul.f32 %v965, %v1060
        %v1151 = vmul.f32 %v969, %v1056
        %v1152 = vmul.f32 %v969, %v1060
        %v1153 = vmul.f32 %v973, %v1056
        %v1154 = vmul.f32 %v973, %v1060
        %v1155 = vmul.f32 %v977, %v1056
        %v1156 = vmul.f32 %v977, %v1060
        %v1157 = vmul.f32 %v981, %v1056
        %v1158 = vmul.f32 %v981, %v1060
        %v1159 = vmul.f32 %v985, %v1056
        %v1160 = vmul.f32 %v985, %v1060
        %v1161 = vmul.f32 %v989, %v1056
        %v1162 = vmul.f32 %v989, %v1060
        %v1163 = vmul.f32 %v993, %v1056
        %v1164 = vmul.f32 %v993, %v1060
        %v1165 = vmul.f32 %v997, %v1056
        %v1166 = vmul.f32 %v997, %v1060
        %v1167 = vmul.f32 %v1001, %v1056
        %v1168 = vmul.f32 %v1001, %v1060
        %v1169 = vmul.f32 %v1005, %v1056
        %v1170 = vmul.f32 %v1005, %v1060
        %v1171 = vmul.f32 %v1009, %v1056
        %v1172 = vmul.f32 %v1009, %v1060
        %v1173 = vmul.f32 %v1013, %v1056
        %v1174 = vmul.f32 %v1013, %v1060
        %v1175 = vmul.f32 %v1017, %v1056
        %v1176 = vmul.f32 %v1017, %v1060
        %v1177 = vmul.f32 %v1021, %v1056
        %v1178 = vmul.f32 %v1021, %v1060
        %v1179 = vmul.f32 %v1025, %v1056
        %v1180 = vmul.f32 %v1025, %v1060
        %v1181 = vmul.f32 %v1029, %v1056
        %v1182 = vmul.f32 %v1029, %v1060
        %v1183 = vmul.f32 %v1033, %v1056
        %v1184 = vmul.f32 %v1033, %v1060
        %v1185 = vmul.f32 %v1037, %v1056
        %v1186 = vmul.f32 %v1037, %v1060
        %v1187 = vmul.f32 %v1041, %v1056
        %v1188 = vmul.f32 %v1041, %v1060
        %v1189 = vadd.f32 %v659, %v1061
        %v1190 = vadd.f32 %v660, %v1062
        %v1191 = vadd.f32 %v661, %v1063
        %v1192 = vadd.f32 %v662, %v1064
        %v1193 = vadd.f32 %v663, %v1065
        %v1194 = vadd.f32 %v664, %v1066
        %v1195 = vadd.f32 %v665, %v1067
        %v1196 = vadd.f32 %v666, %v1068
        %v1197 = vadd.f32 %v667, %v1069
        %v1198 = vadd.f32 %v668, %v1070
        %v1199 = vadd.f32 %v669, %v1071
        %v1200 = vadd.f32 %v670, %v1072
        %v1201 = vadd.f32 %v671, %v1073
        %v1202 = vadd.f32 %v672, %v1074
        %v1203 = vadd.f32 %v673, %v1075
        %v1204 = vadd.f32 %v674, %v1076
        %v1205 = vadd.f32 %v675, %v1077
        %v1206 = vadd.f32 %v676, %v1078
        %v1207 = vadd.f32 %v677, %v1079
        %v1208 = vadd.f32 %v678, %v1080
        %v1209 = vadd.f32 %v679, %v1081
        %v1210 = vadd.f32 %v680, %v1082
        %v1211 = vadd.f32 %v681, %v1083
        %v1212 = vadd.f32 %v682, %v1084
        %v1213 = vadd.f32 %v683, %v1085
        %v1214 = vadd.f32 %v684, %v1086
        %v1215 = vadd.f32 %v685, %v1087
        %v1216 = vadd.f32 %v686, %v1088
        %v1217 = vadd.f32 %v687, %v1089
        %v1218 = vadd.f32 %v688, %v1090
        %v1219 = vadd.f32 %v689, %v1091
        %v1220 = vadd.f32 %v690, %v1092
        %v1221 = vadd.f32 %v691, %v1093
        %v1222 = vadd.f32 %v692, %v1094
        %v1223 = vadd.f32 %v693, %v1095
        %v1224 = vadd.f32 %v694, %v1096
        %v1225 = vadd.f32 %v695, %v1097
        %v1226 = vadd.f32 %v696, %v1098
        %v1227 = vadd.f32 %v697, %v1099
        %v1228 = vadd.f32 %v698, %v1100
        %v1229 = vadd.f32 %v699, %v1101
        %v1230 = vadd.f32 %v700, %v1102
        %v1231 = vadd.f32 %v701, %v1103
        %v1232 = vadd.f32 %v702, %v1104
        %v1233 = vadd.f32 %v703, %v1105
        %v1234 = vadd.f32 %v704, %v1106
        %v1235 = vadd.f32 %v705, %v1107
        %v1236 = vadd.f32 %v706, %v1108
        %v1237 = vadd.f32 %v707, %v1109
        %v1238 = vadd.f32 %v708, %v1110
        %v1239 = vadd.f32 %v709, %v1111
        %v1240 = vadd.f32 %v710, %v1112
        %v1241 = vadd.f32 %v711, %v1113
        %v1242 = vadd.f32 %v712, %v1114
        %v1243 = vadd.f32 %v713, %v1115
        %v1244 = vadd.f32 %v714, %v1116
        %v1245 = vadd.f32 %v715, %v1117
        %v1246 = vadd.f32 %v716, %v1118
        %v1247 = vadd.f32 %v717, %v1119
        %v1248 = vadd.f32 %v718, %v1120
        %v1249 = vadd.f32 %v719, %v1121
        %v1250 = vadd.f32 %v720, %v1122
        %v1251 = vadd.f32 %v721, %v1123
        %v1252 = vadd.f32 %v722, %v1124
        %v1253 = vadd.f32 %v723, %v1125
        %v1254 = vadd.f32 %v724, %v1126
        %v1255 = vadd.f32 %v725, %v1127
        %v1256 = vadd.f32 %v726, %v1128
        %v1257 = vadd.f32 %v727, %v1129
        %v1258 = vadd.f32 %v728, %v1130
        %v1259 = vadd.f32 %v729, %v1131
        %v1260 = vadd.f32 %v730, %v1132
        %v1261 = vadd.f32 %v731, %v1133
        %v1262 = vadd.f32 %v732, %v1134
        %v1263 = vadd.f32 %v733, %v1135
        %v1264 = vadd.f32 %v734, %v1136
        %v1265 = vadd.f32 %v735, %v1137
        %v1266 = vadd.f32 %v736, %v1138
        %v1267 = vadd.f32 %v737, %v1139
        %v1268 = vadd.f32 %v738, %v1140
        %v1269 = vadd.f32 %v739, %v1141
        %v1270 = vadd.f32 %v740, %v1142
        %v1271 = vadd.f32 %v741, %v1143
        %v1272 = vadd.f32 %v742, %v1144
        %v1273 = vadd.f32 %v743, %v1145
        %v1274 = vadd.f32 %v744, %v1146
        %v1275 = vadd.f32 %v745, %v1147
        %v1276 = vadd.f32 %v746, %v1148
        %v1277 = vadd.f32 %v747, %v1149
        %v1278 = vadd.f32 %v748, %v1150
        %v1279 = vadd.f32 %v749, %v1151
        %v1280 = vadd.f32 %v750, %v1152
        %v1281 = vadd.f32 %v751, %v1153
        %v1282 = vadd.f32 %v752, %v1154
        %v1283 = vadd.f32 %v753, %v1155
        %v1284 = vadd.f32 %v754, %v1156
        %v1285 = vadd.f32 %v755, %v1157
        %v1286 = vadd.f32 %v756, %v1158
        %v1287 = vadd.f32 %v757, %v1159
        %v1288 = vadd.f32 %v758, %v1160
        %v1289 = vadd.f32 %v759, %v1161
        %v1290 = vadd.f32 %v760, %v1162
        %v1291 = vadd.f32 %v761, %v1163
        %v1292 = vadd.f32 %v762, %v1164
        %v1293 = vadd.f32 %v763, %v1165
        %v1294 = vadd.f32 %v764, %v1166
        %v1295 = vadd.f32 %v765, %v1167
        %v1296 = vadd.f32 %v766, %v1168
        %v1297 = vadd.f32 %v767, %v1169
        %v1298 = vadd.f32 %v768, %v1170
        %v1299 = vadd.f32 %v769, %v1171
        %v1300 = vadd.f32 %v770, %v1172
        %v1301 = vadd.f32 %v771, %v1173
        %v1302 = vadd.f32 %v772, %v1174
        %v1303 = vadd.f32 %v773, %v1175
        %v1304 = vadd.f32 %v774, %v1176
        %v1305 = vadd.f32 %v775, %v1177
        %v1306 = vadd.f32 %v776, %v1178
        %v1307 = vadd.f32 %v777, %v1179
        %v1308 = vadd.f32 %v778, %v1180
        %v1309 = vadd.f32 %v779, %v1181
        %v1310 = vadd.f32 %v780, %v1182
        %v1311 = vadd.f32 %v781, %v1183
        %v1312 = vadd.f32 %v782, %v1184
        %v1313 = vadd.f32 %v783, %v1185
        %v1314 = vadd.f32 %v784, %v1186
        %v1315 = vadd.f32 %v785, %v1187
        %v1316 = vadd.f32 %v786, %v1188
        %1317 = vset.pattern.permute.xlu0 2
        %1318 = vperm.xlu0 %1317, %v256
        %v1319 = vpop.permute.xlu0 %1318
        %1321 = vset.pattern.permute.xlu0 2
        %1322 = vperm.xlu0 %1321, %v257
        %v1323 = vpop.permute.xlu0 %1322
        %1325 = vset.pattern.permute.xlu0 2
        %1326 = vperm.xlu0 %1325, %v258
        %v1327 = vpop.permute.xlu0 %1326
        %1329 = vset.pattern.permute.xlu0 2
        %1330 = vperm.xlu0 %1329, %v259
        %v1331 = vpop.permute.xlu0 %1330
        %1333 = vset.pattern.permute.xlu0 2
        %1334 = vperm.xlu0 %1333, %v260
        %v1335 = vpop.permute.xlu0 %1334
        %1337 = vset.pattern.permute.xlu0 2
        %1338 = vperm.xlu0 %1337, %v261
        %v1339 = vpop.permute.xlu0 %1338
        %1341 = vset.pattern.permute.xlu0 2
        %1342 = vperm.xlu0 %1341, %v262
        %v1343 = vpop.permute.xlu0 %1342
        %1345 = vset.pattern.permute.xlu0 2
        %1346 = vperm.xlu0 %1345, %v263
        %v1347 = vpop.permute.xlu0 %1346
        %1349 = vset.pattern.permute.xlu0 2
        %1350 = vperm.xlu0 %1349, %v264
        %v1351 = vpop.permute.xlu0 %1350
        %1353 = vset.pattern.permute.xlu0 2
        %1354 = vperm.xlu0 %1353, %v265
        %v1355 = vpop.permute.xlu0 %1354
        %1357 = vset.pattern.permute.xlu0 2
        %1358 = vperm.xlu0 %1357, %v266
        %v1359 = vpop.permute.xlu0 %1358
        %1361 = vset.pattern.permute.xlu0 2
        %1362 = vperm.xlu0 %1361, %v267
        %v1363 = vpop.permute.xlu0 %1362
        %1365 = vset.pattern.permute.xlu0 2
        %1366 = vperm.xlu0 %1365, %v268
        %v1367 = vpop.permute.xlu0 %1366
        %1369 = vset.pattern.permute.xlu0 2
        %1370 = vperm.xlu0 %1369, %v269
        %v1371 = vpop.permute.xlu0 %1370
        %1373 = vset.pattern.permute.xlu0 2
        %1374 = vperm.xlu0 %1373, %v270
        %v1375 = vpop.permute.xlu0 %1374
        %1377 = vset.pattern.permute.xlu0 2
        %1378 = vperm.xlu0 %1377, %v271
        %v1379 = vpop.permute.xlu0 %1378
        %1381 = vset.pattern.permute.xlu0 2
        %1382 = vperm.xlu0 %1381, %v272
        %v1383 = vpop.permute.xlu0 %1382
        %1385 = vset.pattern.permute.xlu0 2
        %1386 = vperm.xlu0 %1385, %v273
        %v1387 = vpop.permute.xlu0 %1386
        %1389 = vset.pattern.permute.xlu0 2
        %1390 = vperm.xlu0 %1389, %v274
        %v1391 = vpop.permute.xlu0 %1390
        %1393 = vset.pattern.permute.xlu0 2
        %1394 = vperm.xlu0 %1393, %v275
        %v1395 = vpop.permute.xlu0 %1394
        %1397 = vset.pattern.permute.xlu0 2
        %1398 = vperm.xlu0 %1397, %v276
        %v1399 = vpop.permute.xlu0 %1398
        %1401 = vset.pattern.permute.xlu0 2
        %1402 = vperm.xlu0 %1401, %v277
        %v1403 = vpop.permute.xlu0 %1402
        %1405 = vset.pattern.permute.xlu0 2
        %1406 = vperm.xlu0 %1405, %v278
        %v1407 = vpop.permute.xlu0 %1406
        %1409 = vset.pattern.permute.xlu0 2
        %1410 = vperm.xlu0 %1409, %v279
        %v1411 = vpop.permute.xlu0 %1410
        %1413 = vset.pattern.permute.xlu0 2
        %1414 = vperm.xlu0 %1413, %v280
        %v1415 = vpop.permute.xlu0 %1414
        %1417 = vset.pattern.permute.xlu0 2
        %1418 = vperm.xlu0 %1417, %v281
        %v1419 = vpop.permute.xlu0 %1418
        %1421 = vset.pattern.permute.xlu0 2
        %1422 = vperm.xlu0 %1421, %v282
        %v1423 = vpop.permute.xlu0 %1422
        %1425 = vset.pattern.permute.xlu0 2
        %1426 = vperm.xlu0 %1425, %v283
        %v1427 = vpop.permute.xlu0 %1426
        %1429 = vset.pattern.permute.xlu0 2
        %1430 = vperm.xlu0 %1429, %v284
        %v1431 = vpop.permute.xlu0 %1430
        %1433 = vset.pattern.permute.xlu0 2
        %1434 = vperm.xlu0 %1433, %v285
        %v1435 = vpop.permute.xlu0 %1434
        %1437 = vset.pattern.permute.xlu0 2
        %1438 = vperm.xlu0 %1437, %v286
        %v1439 = vpop.permute.xlu0 %1438
        %1441 = vset.pattern.permute.xlu0 2
        %1442 = vperm.xlu0 %1441, %v287
        %v1443 = vpop.permute.xlu0 %1442
        %1445 = vset.pattern.permute.xlu0 2
        %1446 = vperm.xlu0 %1445, %v288
        %v1447 = vpop.permute.xlu0 %1446
        %1449 = vset.pattern.permute.xlu0 2
        %1450 = vperm.xlu0 %1449, %v289
        %v1451 = vpop.permute.xlu0 %1450
        %1453 = vset.pattern.permute.xlu0 2
        %1454 = vperm.xlu0 %1453, %v290
        %v1455 = vpop.permute.xlu0 %1454
        %1457 = vset.pattern.permute.xlu0 2
        %1458 = vperm.xlu0 %1457, %v291
        %v1459 = vpop.permute.xlu0 %1458
        %1461 = vset.pattern.permute.xlu0 2
        %1462 = vperm.xlu0 %1461, %v292
        %v1463 = vpop.permute.xlu0 %1462
        %1465 = vset.pattern.permute.xlu0 2
        %1466 = vperm.xlu0 %1465, %v293
        %v1467 = vpop.permute.xlu0 %1466
        %1469 = vset.pattern.permute.xlu0 2
        %1470 = vperm.xlu0 %1469, %v294
        %v1471 = vpop.permute.xlu0 %1470
        %1473 = vset.pattern.permute.xlu0 2
        %1474 = vperm.xlu0 %1473, %v295
        %v1475 = vpop.permute.xlu0 %1474
        %1477 = vset.pattern.permute.xlu0 2
        %1478 = vperm.xlu0 %1477, %v296
        %v1479 = vpop.permute.xlu0 %1478
        %1481 = vset.pattern.permute.xlu0 2
        %1482 = vperm.xlu0 %1481, %v297
        %v1483 = vpop.permute.xlu0 %1482
        %1485 = vset.pattern.permute.xlu0 2
        %1486 = vperm.xlu0 %1485, %v298
        %v1487 = vpop.permute.xlu0 %1486
        %1489 = vset.pattern.permute.xlu0 2
        %1490 = vperm.xlu0 %1489, %v299
        %v1491 = vpop.permute.xlu0 %1490
        %1493 = vset.pattern.permute.xlu0 2
        %1494 = vperm.xlu0 %1493, %v300
        %v1495 = vpop.permute.xlu0 %1494
        %1497 = vset.pattern.permute.xlu0 2
        %1498 = vperm.xlu0 %1497, %v301
        %v1499 = vpop.permute.xlu0 %1498
        %1501 = vset.pattern.permute.xlu0 2
        %1502 = vperm.xlu0 %1501, %v302
        %v1503 = vpop.permute.xlu0 %1502
        %1505 = vset.pattern.permute.xlu0 2
        %1506 = vperm.xlu0 %1505, %v303
        %v1507 = vpop.permute.xlu0 %1506
        %1509 = vset.pattern.permute.xlu0 2
        %1510 = vperm.xlu0 %1509, %v304
        %v1511 = vpop.permute.xlu0 %1510
        %1513 = vset.pattern.permute.xlu0 2
        %1514 = vperm.xlu0 %1513, %v305
        %v1515 = vpop.permute.xlu0 %1514
        %1517 = vset.pattern.permute.xlu0 2
        %1518 = vperm.xlu0 %1517, %v306
        %v1519 = vpop.permute.xlu0 %1518
        %1521 = vset.pattern.permute.xlu0 2
        %1522 = vperm.xlu0 %1521, %v307
        %v1523 = vpop.permute.xlu0 %1522
        %1525 = vset.pattern.permute.xlu0 2
        %1526 = vperm.xlu0 %1525, %v308
        %v1527 = vpop.permute.xlu0 %1526
        %1529 = vset.pattern.permute.xlu0 2
        %1530 = vperm.xlu0 %1529, %v309
        %v1531 = vpop.permute.xlu0 %1530
        %1533 = vset.pattern.permute.xlu0 2
        %1534 = vperm.xlu0 %1533, %v310
        %v1535 = vpop.permute.xlu0 %1534
        %1537 = vset.pattern.permute.xlu0 2
        %1538 = vperm.xlu0 %1537, %v311
        %v1539 = vpop.permute.xlu0 %1538
        %1541 = vset.pattern.permute.xlu0 2
        %1542 = vperm.xlu0 %1541, %v312
        %v1543 = vpop.permute.xlu0 %1542
        %1545 = vset.pattern.permute.xlu0 2
        %1546 = vperm.xlu0 %1545, %v313
        %v1547 = vpop.permute.xlu0 %1546
        %1549 = vset.pattern.permute.xlu0 2
        %1550 = vperm.xlu0 %1549, %v314
        %v1551 = vpop.permute.xlu0 %1550
        %1553 = vset.pattern.permute.xlu0 2
        %1554 = vperm.xlu0 %1553, %v315
        %v1555 = vpop.permute.xlu0 %1554
        %1557 = vset.pattern.permute.xlu0 2
        %1558 = vperm.xlu0 %1557, %v316
        %v1559 = vpop.permute.xlu0 %1558
        %1561 = vset.pattern.permute.xlu0 2
        %1562 = vperm.xlu0 %1561, %v317
        %v1563 = vpop.permute.xlu0 %1562
        %1565 = vset.pattern.permute.xlu0 2
        %1566 = vperm.xlu0 %1565, %v318
        %v1567 = vpop.permute.xlu0 %1566
        %1569 = vset.pattern.permute.xlu0 2
        %1570 = vperm.xlu0 %1569, %v319
        %v1571 = vpop.permute.xlu0 %1570
        %v1573 = vlaneseq
        %v1574 = vshrl.u32 %v1573, 7
        %v1575 = vsub.s32 2, %v1574
        %v1576 = vrot.slane %v255, %v1575
        %v1577 = vlaneseq
        %v1578 = vshrl.u32 %v1577, 7
        %v1579 = vsub.s32 6, %v1578
        %v1580 = vrot.slane %v255, %v1579
        %v1583 = vlaneseq
        %v1584 = vshrl.u32 %v1583, 7
        %v1585 = vsub.s32 2, %v1584
        %v1586 = vrot.slane %v1576, %v1585
        %v1587 = vlaneseq
        %v1588 = vshrl.u32 %v1587, 7
        %v1589 = vsub.s32 2, %v1588
        %v1590 = vrot.slane %v1580, %v1589
        %v1591 = vmul.f32 %v1319, %v1586
        %v1592 = vmul.f32 %v1319, %v1590
        %v1593 = vmul.f32 %v1323, %v1586
        %v1594 = vmul.f32 %v1323, %v1590
        %v1595 = vmul.f32 %v1327, %v1586
        %v1596 = vmul.f32 %v1327, %v1590
        %v1597 = vmul.f32 %v1331, %v1586
        %v1598 = vmul.f32 %v1331, %v1590
        %v1599 = vmul.f32 %v1335, %v1586
        %v1600 = vmul.f32 %v1335, %v1590
        %v1601 = vmul.f32 %v1339, %v1586
        %v1602 = vmul.f32 %v1339, %v1590
        %v1603 = vmul.f32 %v1343, %v1586
        %v1604 = vmul.f32 %v1343, %v1590
        %v1605 = vmul.f32 %v1347, %v1586
        %v1606 = vmul.f32 %v1347, %v1590
        %v1607 = vmul.f32 %v1351, %v1586
        %v1608 = vmul.f32 %v1351, %v1590
        %v1609 = vmul.f32 %v1355, %v1586
        %v1610 = vmul.f32 %v1355, %v1590
        %v1611 = vmul.f32 %v1359, %v1586
        %v1612 = vmul.f32 %v1359, %v1590
        %v1613 = vmul.f32 %v1363, %v1586
        %v1614 = vmul.f32 %v1363, %v1590
        %v1615 = vmul.f32 %v1367, %v1586
        %v1616 = vmul.f32 %v1367, %v1590
        %v1617 = vmul.f32 %v1371, %v1586
        %v1618 = vmul.f32 %v1371, %v1590
        %v1619 = vmul.f32 %v1375, %v1586
        %v1620 = vmul.f32 %v1375, %v1590
        %v1621 = vmul.f32 %v1379, %v1586
        %v1622 = vmul.f32 %v1379, %v1590
        %v1623 = vmul.f32 %v1383, %v1586
        %v1624 = vmul.f32 %v1383, %v1590
        %v1625 = vmul.f32 %v1387, %v1586
        %v1626 = vmul.f32 %v1387, %v1590
        %v1627 = vmul.f32 %v1391, %v1586
        %v1628 = vmul.f32 %v1391, %v1590
        %v1629 = vmul.f32 %v1395, %v1586
        %v1630 = vmul.f32 %v1395, %v1590
        %v1631 = vmul.f32 %v1399, %v1586
        %v1632 = vmul.f32 %v1399, %v1590
        %v1633 = vmul.f32 %v1403, %v1586
        %v1634 = vmul.f32 %v1403, %v1590
        %v1635 = vmul.f32 %v1407, %v1586
        %v1636 = vmul.f32 %v1407, %v1590
        %v1637 = vmul.f32 %v1411, %v1586
        %v1638 = vmul.f32 %v1411, %v1590
        %v1639 = vmul.f32 %v1415, %v1586
        %v1640 = vmul.f32 %v1415, %v1590
        %v1641 = vmul.f32 %v1419, %v1586
        %v1642 = vmul.f32 %v1419, %v1590
        %v1643 = vmul.f32 %v1423, %v1586
        %v1644 = vmul.f32 %v1423, %v1590
        %v1645 = vmul.f32 %v1427, %v1586
        %v1646 = vmul.f32 %v1427, %v1590
        %v1647 = vmul.f32 %v1431, %v1586
        %v1648 = vmul.f32 %v1431, %v1590
        %v1649 = vmul.f32 %v1435, %v1586
        %v1650 = vmul.f32 %v1435, %v1590
        %v1651 = vmul.f32 %v1439, %v1586
        %v1652 = vmul.f32 %v1439, %v1590
        %v1653 = vmul.f32 %v1443, %v1586
        %v1654 = vmul.f32 %v1443, %v1590
        %v1655 = vmul.f32 %v1447, %v1586
        %v1656 = vmul.f32 %v1447, %v1590
        %v1657 = vmul.f32 %v1451, %v1586
        %v1658 = vmul.f32 %v1451, %v1590
        %v1659 = vmul.f32 %v1455, %v1586
        %v1660 = vmul.f32 %v1455, %v1590
        %v1661 = vmul.f32 %v1459, %v1586
        %v1662 = vmul.f32 %v1459, %v1590
        %v1663 = vmul.f32 %v1463, %v1586
        %v1664 = vmul.f32 %v1463, %v1590
        %v1665 = vmul.f32 %v1467, %v1586
        %v1666 = vmul.f32 %v1467, %v1590
        %v1667 = vmul.f32 %v1471, %v1586
        %v1668 = vmul.f32 %v1471, %v1590
        %v1669 = vmul.f32 %v1475, %v1586
        %v1670 = vmul.f32 %v1475, %v1590
        %v1671 = vmul.f32 %v1479, %v1586
        %v1672 = vmul.f32 %v1479, %v1590
        %v1673 = vmul.f32 %v1483, %v1586
        %v1674 = vmul.f32 %v1483, %v1590
        %v1675 = vmul.f32 %v1487, %v1586
        %v1676 = vmul.f32 %v1487, %v1590
        %v1677 = vmul.f32 %v1491, %v1586
        %v1678 = vmul.f32 %v1491, %v1590
        %v1679 = vmul.f32 %v1495, %v1586
        %v1680 = vmul.f32 %v1495, %v1590
        %v1681 = vmul.f32 %v1499, %v1586
        %v1682 = vmul.f32 %v1499, %v1590
        %v1683 = vmul.f32 %v1503, %v1586
        %v1684 = vmul.f32 %v1503, %v1590
        %v1685 = vmul.f32 %v1507, %v1586
        %v1686 = vmul.f32 %v1507, %v1590
        %v1687 = vmul.f32 %v1511, %v1586
        %v1688 = vmul.f32 %v1511, %v1590
        %v1689 = vmul.f32 %v1515, %v1586
        %v1690 = vmul.f32 %v1515, %v1590
        %v1691 = vmul.f32 %v1519, %v1586
        %v1692 = vmul.f32 %v1519, %v1590
        %v1693 = vmul.f32 %v1523, %v1586
        %v1694 = vmul.f32 %v1523, %v1590
        %v1695 = vmul.f32 %v1527, %v1586
        %v1696 = vmul.f32 %v1527, %v1590
        %v1697 = vmul.f32 %v1531, %v1586
        %v1698 = vmul.f32 %v1531, %v1590
        %v1699 = vmul.f32 %v1535, %v1586
        %v1700 = vmul.f32 %v1535, %v1590
        %v1701 = vmul.f32 %v1539, %v1586
        %v1702 = vmul.f32 %v1539, %v1590
        %v1703 = vmul.f32 %v1543, %v1586
        %v1704 = vmul.f32 %v1543, %v1590
        %v1705 = vmul.f32 %v1547, %v1586
        %v1706 = vmul.f32 %v1547, %v1590
        %v1707 = vmul.f32 %v1551, %v1586
        %v1708 = vmul.f32 %v1551, %v1590
        %v1709 = vmul.f32 %v1555, %v1586
        %v1710 = vmul.f32 %v1555, %v1590
        %v1711 = vmul.f32 %v1559, %v1586
        %v1712 = vmul.f32 %v1559, %v1590
        %v1713 = vmul.f32 %v1563, %v1586
        %v1714 = vmul.f32 %v1563, %v1590
        %v1715 = vmul.f32 %v1567, %v1586
        %v1716 = vmul.f32 %v1567, %v1590
        %v1717 = vmul.f32 %v1571, %v1586
        %v1718 = vmul.f32 %v1571, %v1590
        %v1719 = vadd.f32 %v1189, %v1591
        %v1720 = vadd.f32 %v1190, %v1592
        %v1721 = vadd.f32 %v1191, %v1593
        %v1722 = vadd.f32 %v1192, %v1594
        %v1723 = vadd.f32 %v1193, %v1595
        %v1724 = vadd.f32 %v1194, %v1596
        %v1725 = vadd.f32 %v1195, %v1597
        %v1726 = vadd.f32 %v1196, %v1598
        %v1727 = vadd.f32 %v1197, %v1599
        %v1728 = vadd.f32 %v1198, %v1600
        %v1729 = vadd.f32 %v1199, %v1601
        %v1730 = vadd.f32 %v1200, %v1602
        %v1731 = vadd.f32 %v1201, %v1603
        %v1732 = vadd.f32 %v1202, %v1604
        %v1733 = vadd.f32 %v1203, %v1605
        %v1734 = vadd.f32 %v1204, %v1606
        %v1735 = vadd.f32 %v1205, %v1607
        %v1736 = vadd.f32 %v1206, %v1608
        %v1737 = vadd.f32 %v1207, %v1609
        %v1738 = vadd.f32 %v1208, %v1610
        %v1739 = vadd.f32 %v1209, %v1611
        %v1740 = vadd.f32 %v1210, %v1612
        %v1741 = vadd.f32 %v1211, %v1613
        %v1742 = vadd.f32 %v1212, %v1614
        %v1743 = vadd.f32 %v1213, %v1615
        %v1744 = vadd.f32 %v1214, %v1616
        %v1745 = vadd.f32 %v1215, %v1617
        %v1746 = vadd.f32 %v1216, %v1618
        %v1747 = vadd.f32 %v1217, %v1619
        %v1748 = vadd.f32 %v1218, %v1620
        %v1749 = vadd.f32 %v1219, %v1621
        %v1750 = vadd.f32 %v1220, %v1622
        %v1751 = vadd.f32 %v1221, %v1623
        %v1752 = vadd.f32 %v1222, %v1624
        %v1753 = vadd.f32 %v1223, %v1625
        %v1754 = vadd.f32 %v1224, %v1626
        %v1755 = vadd.f32 %v1225, %v1627
        %v1756 = vadd.f32 %v1226, %v1628
        %v1757 = vadd.f32 %v1227, %v1629
        %v1758 = vadd.f32 %v1228, %v1630
        %v1759 = vadd.f32 %v1229, %v1631
        %v1760 = vadd.f32 %v1230, %v1632
        %v1761 = vadd.f32 %v1231, %v1633
        %v1762 = vadd.f32 %v1232, %v1634
        %v1763 = vadd.f32 %v1233, %v1635
        %v1764 = vadd.f32 %v1234, %v1636
        %v1765 = vadd.f32 %v1235, %v1637
        %v1766 = vadd.f32 %v1236, %v1638
        %v1767 = vadd.f32 %v1237, %v1639
        %v1768 = vadd.f32 %v1238, %v1640
        %v1769 = vadd.f32 %v1239, %v1641
        %v1770 = vadd.f32 %v1240, %v1642
        %v1771 = vadd.f32 %v1241, %v1643
        %v1772 = vadd.f32 %v1242, %v1644
        %v1773 = vadd.f32 %v1243, %v1645
        %v1774 = vadd.f32 %v1244, %v1646
        %v1775 = vadd.f32 %v1245, %v1647
        %v1776 = vadd.f32 %v1246, %v1648
        %v1777 = vadd.f32 %v1247, %v1649
        %v1778 = vadd.f32 %v1248, %v1650
        %v1779 = vadd.f32 %v1249, %v1651
        %v1780 = vadd.f32 %v1250, %v1652
        %v1781 = vadd.f32 %v1251, %v1653
        %v1782 = vadd.f32 %v1252, %v1654
        %v1783 = vadd.f32 %v1253, %v1655
        %v1784 = vadd.f32 %v1254, %v1656
        %v1785 = vadd.f32 %v1255, %v1657
        %v1786 = vadd.f32 %v1256, %v1658
        %v1787 = vadd.f32 %v1257, %v1659
        %v1788 = vadd.f32 %v1258, %v1660
        %v1789 = vadd.f32 %v1259, %v1661
        %v1790 = vadd.f32 %v1260, %v1662
        %v1791 = vadd.f32 %v1261, %v1663
        %v1792 = vadd.f32 %v1262, %v1664
        %v1793 = vadd.f32 %v1263, %v1665
        %v1794 = vadd.f32 %v1264, %v1666
        %v1795 = vadd.f32 %v1265, %v1667
        %v1796 = vadd.f32 %v1266, %v1668
        %v1797 = vadd.f32 %v1267, %v1669
        %v1798 = vadd.f32 %v1268, %v1670
        %v1799 = vadd.f32 %v1269, %v1671
        %v1800 = vadd.f32 %v1270, %v1672
        %v1801 = vadd.f32 %v1271, %v1673
        %v1802 = vadd.f32 %v1272, %v1674
        %v1803 = vadd.f32 %v1273, %v1675
        %v1804 = vadd.f32 %v1274, %v1676
        %v1805 = vadd.f32 %v1275, %v1677
        %v1806 = vadd.f32 %v1276, %v1678
        %v1807 = vadd.f32 %v1277, %v1679
        %v1808 = vadd.f32 %v1278, %v1680
        %v1809 = vadd.f32 %v1279, %v1681
        %v1810 = vadd.f32 %v1280, %v1682
        %v1811 = vadd.f32 %v1281, %v1683
        %v1812 = vadd.f32 %v1282, %v1684
        %v1813 = vadd.f32 %v1283, %v1685
        %v1814 = vadd.f32 %v1284, %v1686
        %v1815 = vadd.f32 %v1285, %v1687
        %v1816 = vadd.f32 %v1286, %v1688
        %v1817 = vadd.f32 %v1287, %v1689
        %v1818 = vadd.f32 %v1288, %v1690
        %v1819 = vadd.f32 %v1289, %v1691
        %v1820 = vadd.f32 %v1290, %v1692
        %v1821 = vadd.f32 %v1291, %v1693
        %v1822 = vadd.f32 %v1292, %v1694
        %v1823 = vadd.f32 %v1293, %v1695
        %v1824 = vadd.f32 %v1294, %v1696
        %v1825 = vadd.f32 %v1295, %v1697
        %v1826 = vadd.f32 %v1296, %v1698
        %v1827 = vadd.f32 %v1297, %v1699
        %v1828 = vadd.f32 %v1298, %v1700
        %v1829 = vadd.f32 %v1299, %v1701
        %v1830 = vadd.f32 %v1300, %v1702
        %v1831 = vadd.f32 %v1301, %v1703
        %v1832 = vadd.f32 %v1302, %v1704
        %v1833 = vadd.f32 %v1303, %v1705
        %v1834 = vadd.f32 %v1304, %v1706
        %v1835 = vadd.f32 %v1305, %v1707
        %v1836 = vadd.f32 %v1306, %v1708
        %v1837 = vadd.f32 %v1307, %v1709
        %v1838 = vadd.f32 %v1308, %v1710
        %v1839 = vadd.f32 %v1309, %v1711
        %v1840 = vadd.f32 %v1310, %v1712
        %v1841 = vadd.f32 %v1311, %v1713
        %v1842 = vadd.f32 %v1312, %v1714
        %v1843 = vadd.f32 %v1313, %v1715
        %v1844 = vadd.f32 %v1314, %v1716
        %v1845 = vadd.f32 %v1315, %v1717
        %v1846 = vadd.f32 %v1316, %v1718
        %1847 = vset.pattern.permute.xlu0 3
        %1848 = vperm.xlu0 %1847, %v256
        %v1849 = vpop.permute.xlu0 %1848
        %1851 = vset.pattern.permute.xlu0 3
        %1852 = vperm.xlu0 %1851, %v257
        %v1853 = vpop.permute.xlu0 %1852
        %1855 = vset.pattern.permute.xlu0 3
        %1856 = vperm.xlu0 %1855, %v258
        %v1857 = vpop.permute.xlu0 %1856
        %1859 = vset.pattern.permute.xlu0 3
        %1860 = vperm.xlu0 %1859, %v259
        %v1861 = vpop.permute.xlu0 %1860
        %1863 = vset.pattern.permute.xlu0 3
        %1864 = vperm.xlu0 %1863, %v260
        %v1865 = vpop.permute.xlu0 %1864
        %1867 = vset.pattern.permute.xlu0 3
        %1868 = vperm.xlu0 %1867, %v261
        %v1869 = vpop.permute.xlu0 %1868
        %1871 = vset.pattern.permute.xlu0 3
        %1872 = vperm.xlu0 %1871, %v262
        %v1873 = vpop.permute.xlu0 %1872
        %1875 = vset.pattern.permute.xlu0 3
        %1876 = vperm.xlu0 %1875, %v263
        %v1877 = vpop.permute.xlu0 %1876
        %1879 = vset.pattern.permute.xlu0 3
        %1880 = vperm.xlu0 %1879, %v264
        %v1881 = vpop.permute.xlu0 %1880
        %1883 = vset.pattern.permute.xlu0 3
        %1884 = vperm.xlu0 %1883, %v265
        %v1885 = vpop.permute.xlu0 %1884
        %1887 = vset.pattern.permute.xlu0 3
        %1888 = vperm.xlu0 %1887, %v266
        %v1889 = vpop.permute.xlu0 %1888
        %1891 = vset.pattern.permute.xlu0 3
        %1892 = vperm.xlu0 %1891, %v267
        %v1893 = vpop.permute.xlu0 %1892
        %1895 = vset.pattern.permute.xlu0 3
        %1896 = vperm.xlu0 %1895, %v268
        %v1897 = vpop.permute.xlu0 %1896
        %1899 = vset.pattern.permute.xlu0 3
        %1900 = vperm.xlu0 %1899, %v269
        %v1901 = vpop.permute.xlu0 %1900
        %1903 = vset.pattern.permute.xlu0 3
        %1904 = vperm.xlu0 %1903, %v270
        %v1905 = vpop.permute.xlu0 %1904
        %1907 = vset.pattern.permute.xlu0 3
        %1908 = vperm.xlu0 %1907, %v271
        %v1909 = vpop.permute.xlu0 %1908
        %1911 = vset.pattern.permute.xlu0 3
        %1912 = vperm.xlu0 %1911, %v272
        %v1913 = vpop.permute.xlu0 %1912
        %1915 = vset.pattern.permute.xlu0 3
        %1916 = vperm.xlu0 %1915, %v273
        %v1917 = vpop.permute.xlu0 %1916
        %1919 = vset.pattern.permute.xlu0 3
        %1920 = vperm.xlu0 %1919, %v274
        %v1921 = vpop.permute.xlu0 %1920
        %1923 = vset.pattern.permute.xlu0 3
        %1924 = vperm.xlu0 %1923, %v275
        %v1925 = vpop.permute.xlu0 %1924
        %1927 = vset.pattern.permute.xlu0 3
        %1928 = vperm.xlu0 %1927, %v276
        %v1929 = vpop.permute.xlu0 %1928
        %1931 = vset.pattern.permute.xlu0 3
        %1932 = vperm.xlu0 %1931, %v277
        %v1933 = vpop.permute.xlu0 %1932
        %1935 = vset.pattern.permute.xlu0 3
        %1936 = vperm.xlu0 %1935, %v278
        %v1937 = vpop.permute.xlu0 %1936
        %1939 = vset.pattern.permute.xlu0 3
        %1940 = vperm.xlu0 %1939, %v279
        %v1941 = vpop.permute.xlu0 %1940
        %1943 = vset.pattern.permute.xlu0 3
        %1944 = vperm.xlu0 %1943, %v280
        %v1945 = vpop.permute.xlu0 %1944
        %1947 = vset.pattern.permute.xlu0 3
        %1948 = vperm.xlu0 %1947, %v281
        %v1949 = vpop.permute.xlu0 %1948
        %1951 = vset.pattern.permute.xlu0 3
        %1952 = vperm.xlu0 %1951, %v282
        %v1953 = vpop.permute.xlu0 %1952
        %1955 = vset.pattern.permute.xlu0 3
        %1956 = vperm.xlu0 %1955, %v283
        %v1957 = vpop.permute.xlu0 %1956
        %1959 = vset.pattern.permute.xlu0 3
        %1960 = vperm.xlu0 %1959, %v284
        %v1961 = vpop.permute.xlu0 %1960
        %1963 = vset.pattern.permute.xlu0 3
        %1964 = vperm.xlu0 %1963, %v285
        %v1965 = vpop.permute.xlu0 %1964
        %1967 = vset.pattern.permute.xlu0 3
        %1968 = vperm.xlu0 %1967, %v286
        %v1969 = vpop.permute.xlu0 %1968
        %1971 = vset.pattern.permute.xlu0 3
        %1972 = vperm.xlu0 %1971, %v287
        %v1973 = vpop.permute.xlu0 %1972
        %1975 = vset.pattern.permute.xlu0 3
        %1976 = vperm.xlu0 %1975, %v288
        %v1977 = vpop.permute.xlu0 %1976
        %1979 = vset.pattern.permute.xlu0 3
        %1980 = vperm.xlu0 %1979, %v289
        %v1981 = vpop.permute.xlu0 %1980
        %1983 = vset.pattern.permute.xlu0 3
        %1984 = vperm.xlu0 %1983, %v290
        %v1985 = vpop.permute.xlu0 %1984
        %1987 = vset.pattern.permute.xlu0 3
        %1988 = vperm.xlu0 %1987, %v291
        %v1989 = vpop.permute.xlu0 %1988
        %1991 = vset.pattern.permute.xlu0 3
        %1992 = vperm.xlu0 %1991, %v292
        %v1993 = vpop.permute.xlu0 %1992
        %1995 = vset.pattern.permute.xlu0 3
        %1996 = vperm.xlu0 %1995, %v293
        %v1997 = vpop.permute.xlu0 %1996
        %1999 = vset.pattern.permute.xlu0 3
        %2000 = vperm.xlu0 %1999, %v294
        %v2001 = vpop.permute.xlu0 %2000
        %2003 = vset.pattern.permute.xlu0 3
        %2004 = vperm.xlu0 %2003, %v295
        %v2005 = vpop.permute.xlu0 %2004
        %2007 = vset.pattern.permute.xlu0 3
        %2008 = vperm.xlu0 %2007, %v296
        %v2009 = vpop.permute.xlu0 %2008
        %2011 = vset.pattern.permute.xlu0 3
        %2012 = vperm.xlu0 %2011, %v297
        %v2013 = vpop.permute.xlu0 %2012
        %2015 = vset.pattern.permute.xlu0 3
        %2016 = vperm.xlu0 %2015, %v298
        %v2017 = vpop.permute.xlu0 %2016
        %2019 = vset.pattern.permute.xlu0 3
        %2020 = vperm.xlu0 %2019, %v299
        %v2021 = vpop.permute.xlu0 %2020
        %2023 = vset.pattern.permute.xlu0 3
        %2024 = vperm.xlu0 %2023, %v300
        %v2025 = vpop.permute.xlu0 %2024
        %2027 = vset.pattern.permute.xlu0 3
        %2028 = vperm.xlu0 %2027, %v301
        %v2029 = vpop.permute.xlu0 %2028
        %2031 = vset.pattern.permute.xlu0 3
        %2032 = vperm.xlu0 %2031, %v302
        %v2033 = vpop.permute.xlu0 %2032
        %2035 = vset.pattern.permute.xlu0 3
        %2036 = vperm.xlu0 %2035, %v303
        %v2037 = vpop.permute.xlu0 %2036
        %2039 = vset.pattern.permute.xlu0 3
        %2040 = vperm.xlu0 %2039, %v304
        %v2041 = vpop.permute.xlu0 %2040
        %2043 = vset.pattern.permute.xlu0 3
        %2044 = vperm.xlu0 %2043, %v305
        %v2045 = vpop.permute.xlu0 %2044
        %2047 = vset.pattern.permute.xlu0 3
        %2048 = vperm.xlu0 %2047, %v306
        %v2049 = vpop.permute.xlu0 %2048
        %2051 = vset.pattern.permute.xlu0 3
        %2052 = vperm.xlu0 %2051, %v307
        %v2053 = vpop.permute.xlu0 %2052
        %2055 = vset.pattern.permute.xlu0 3
        %2056 = vperm.xlu0 %2055, %v308
        %v2057 = vpop.permute.xlu0 %2056
        %2059 = vset.pattern.permute.xlu0 3
        %2060 = vperm.xlu0 %2059, %v309
        %v2061 = vpop.permute.xlu0 %2060
        %2063 = vset.pattern.permute.xlu0 3
        %2064 = vperm.xlu0 %2063, %v310
        %v2065 = vpop.permute.xlu0 %2064
        %2067 = vset.pattern.permute.xlu0 3
        %2068 = vperm.xlu0 %2067, %v311
        %v2069 = vpop.permute.xlu0 %2068
        %2071 = vset.pattern.permute.xlu0 3
        %2072 = vperm.xlu0 %2071, %v312
        %v2073 = vpop.permute.xlu0 %2072
        %2075 = vset.pattern.permute.xlu0 3
        %2076 = vperm.xlu0 %2075, %v313
        %v2077 = vpop.permute.xlu0 %2076
        %2079 = vset.pattern.permute.xlu0 3
        %2080 = vperm.xlu0 %2079, %v314
        %v2081 = vpop.permute.xlu0 %2080
        %2083 = vset.pattern.permute.xlu0 3
        %2084 = vperm.xlu0 %2083, %v315
        %v2085 = vpop.permute.xlu0 %2084
        %2087 = vset.pattern.permute.xlu0 3
        %2088 = vperm.xlu0 %2087, %v316
        %v2089 = vpop.permute.xlu0 %2088
        %2091 = vset.pattern.permute.xlu0 3
        %2092 = vperm.xlu0 %2091, %v317
        %v2093 = vpop.permute.xlu0 %2092
        %2095 = vset.pattern.permute.xlu0 3
        %2096 = vperm.xlu0 %2095, %v318
        %v2097 = vpop.permute.xlu0 %2096
        %2099 = vset.pattern.permute.xlu0 3
        %2100 = vperm.xlu0 %2099, %v319
        %v2101 = vpop.permute.xlu0 %2100
        %v2103 = vlaneseq
        %v2104 = vshrl.u32 %v2103, 7
        %v2105 = vsub.s32 3, %v2104
        %v2106 = vrot.slane %v255, %v2105
        %v2107 = vlaneseq
        %v2108 = vshrl.u32 %v2107, 7
        %v2109 = vsub.s32 7, %v2108
        %v2110 = vrot.slane %v255, %v2109
        %v2113 = vlaneseq
        %v2114 = vshrl.u32 %v2113, 7
        %v2115 = vsub.s32 3, %v2114
        %v2116 = vrot.slane %v2106, %v2115
        %v2117 = vlaneseq
        %v2118 = vshrl.u32 %v2117, 7
        %v2119 = vsub.s32 3, %v2118
        %v2120 = vrot.slane %v2110, %v2119
        %v2121 = vmul.f32 %v1849, %v2116
        %v2122 = vmul.f32 %v1849, %v2120
        %v2123 = vmul.f32 %v1853, %v2116
        %v2124 = vmul.f32 %v1853, %v2120
        %v2125 = vmul.f32 %v1857, %v2116
        %v2126 = vmul.f32 %v1857, %v2120
        %v2127 = vmul.f32 %v1861, %v2116
        %v2128 = vmul.f32 %v1861, %v2120
        %v2129 = vmul.f32 %v1865, %v2116
        %v2130 = vmul.f32 %v1865, %v2120
        %v2131 = vmul.f32 %v1869, %v2116
        %v2132 = vmul.f32 %v1869, %v2120
        %v2133 = vmul.f32 %v1873, %v2116
        %v2134 = vmul.f32 %v1873, %v2120
        %v2135 = vmul.f32 %v1877, %v2116
        %v2136 = vmul.f32 %v1877, %v2120
        %v2137 = vmul.f32 %v1881, %v2116
        %v2138 = vmul.f32 %v1881, %v2120
        %v2139 = vmul.f32 %v1885, %v2116
        %v2140 = vmul.f32 %v1885, %v2120
        %v2141 = vmul.f32 %v1889, %v2116
        %v2142 = vmul.f32 %v1889, %v2120
        %v2143 = vmul.f32 %v1893, %v2116
        %v2144 = vmul.f32 %v1893, %v2120
        %v2145 = vmul.f32 %v1897, %v2116
        %v2146 = vmul.f32 %v1897, %v2120
        %v2147 = vmul.f32 %v1901, %v2116
        %v2148 = vmul.f32 %v1901, %v2120
        %v2149 = vmul.f32 %v1905, %v2116
        %v2150 = vmul.f32 %v1905, %v2120
        %v2151 = vmul.f32 %v1909, %v2116
        %v2152 = vmul.f32 %v1909, %v2120
        %v2153 = vmul.f32 %v1913, %v2116
        %v2154 = vmul.f32 %v1913, %v2120
        %v2155 = vmul.f32 %v1917, %v2116
        %v2156 = vmul.f32 %v1917, %v2120
        %v2157 = vmul.f32 %v1921, %v2116
        %v2158 = vmul.f32 %v1921, %v2120
        %v2159 = vmul.f32 %v1925, %v2116
        %v2160 = vmul.f32 %v1925, %v2120
        %v2161 = vmul.f32 %v1929, %v2116
        %v2162 = vmul.f32 %v1929, %v2120
        %v2163 = vmul.f32 %v1933, %v2116
        %v2164 = vmul.f32 %v1933, %v2120
        %v2165 = vmul.f32 %v1937, %v2116
        %v2166 = vmul.f32 %v1937, %v2120
        %v2167 = vmul.f32 %v1941, %v2116
        %v2168 = vmul.f32 %v1941, %v2120
        %v2169 = vmul.f32 %v1945, %v2116
        %v2170 = vmul.f32 %v1945, %v2120
        %v2171 = vmul.f32 %v1949, %v2116
        %v2172 = vmul.f32 %v1949, %v2120
        %v2173 = vmul.f32 %v1953, %v2116
        %v2174 = vmul.f32 %v1953, %v2120
        %v2175 = vmul.f32 %v1957, %v2116
        %v2176 = vmul.f32 %v1957, %v2120
        %v2177 = vmul.f32 %v1961, %v2116
        %v2178 = vmul.f32 %v1961, %v2120
        %v2179 = vmul.f32 %v1965, %v2116
        %v2180 = vmul.f32 %v1965, %v2120
        %v2181 = vmul.f32 %v1969, %v2116
        %v2182 = vmul.f32 %v1969, %v2120
        %v2183 = vmul.f32 %v1973, %v2116
        %v2184 = vmul.f32 %v1973, %v2120
        %v2185 = vmul.f32 %v1977, %v2116
        %v2186 = vmul.f32 %v1977, %v2120
        %v2187 = vmul.f32 %v1981, %v2116
        %v2188 = vmul.f32 %v1981, %v2120
        %v2189 = vmul.f32 %v1985, %v2116
        %v2190 = vmul.f32 %v1985, %v2120
        %v2191 = vmul.f32 %v1989, %v2116
        %v2192 = vmul.f32 %v1989, %v2120
        %v2193 = vmul.f32 %v1993, %v2116
        %v2194 = vmul.f32 %v1993, %v2120
        %v2195 = vmul.f32 %v1997, %v2116
        %v2196 = vmul.f32 %v1997, %v2120
        %v2197 = vmul.f32 %v2001, %v2116
        %v2198 = vmul.f32 %v2001, %v2120
        %v2199 = vmul.f32 %v2005, %v2116
        %v2200 = vmul.f32 %v2005, %v2120
        %v2201 = vmul.f32 %v2009, %v2116
        %v2202 = vmul.f32 %v2009, %v2120
        %v2203 = vmul.f32 %v2013, %v2116
        %v2204 = vmul.f32 %v2013, %v2120
        %v2205 = vmul.f32 %v2017, %v2116
        %v2206 = vmul.f32 %v2017, %v2120
        %v2207 = vmul.f32 %v2021, %v2116
        %v2208 = vmul.f32 %v2021, %v2120
        %v2209 = vmul.f32 %v2025, %v2116
        %v2210 = vmul.f32 %v2025, %v2120
        %v2211 = vmul.f32 %v2029, %v2116
        %v2212 = vmul.f32 %v2029, %v2120
        %v2213 = vmul.f32 %v2033, %v2116
        %v2214 = vmul.f32 %v2033, %v2120
        %v2215 = vmul.f32 %v2037, %v2116
        %v2216 = vmul.f32 %v2037, %v2120
        %v2217 = vmul.f32 %v2041, %v2116
        %v2218 = vmul.f32 %v2041, %v2120
        %v2219 = vmul.f32 %v2045, %v2116
        %v2220 = vmul.f32 %v2045, %v2120
        %v2221 = vmul.f32 %v2049, %v2116
        %v2222 = vmul.f32 %v2049, %v2120
        %v2223 = vmul.f32 %v2053, %v2116
        %v2224 = vmul.f32 %v2053, %v2120
        %v2225 = vmul.f32 %v2057, %v2116
        %v2226 = vmul.f32 %v2057, %v2120
        %v2227 = vmul.f32 %v2061, %v2116
        %v2228 = vmul.f32 %v2061, %v2120
        %v2229 = vmul.f32 %v2065, %v2116
        %v2230 = vmul.f32 %v2065, %v2120
        %v2231 = vmul.f32 %v2069, %v2116
        %v2232 = vmul.f32 %v2069, %v2120
        %v2233 = vmul.f32 %v2073, %v2116
        %v2234 = vmul.f32 %v2073, %v2120
        %v2235 = vmul.f32 %v2077, %v2116
        %v2236 = vmul.f32 %v2077, %v2120
        %v2237 = vmul.f32 %v2081, %v2116
        %v2238 = vmul.f32 %v2081, %v2120
        %v2239 = vmul.f32 %v2085, %v2116
        %v2240 = vmul.f32 %v2085, %v2120
        %v2241 = vmul.f32 %v2089, %v2116
        %v2242 = vmul.f32 %v2089, %v2120
        %v2243 = vmul.f32 %v2093, %v2116
        %v2244 = vmul.f32 %v2093, %v2120
        %v2245 = vmul.f32 %v2097, %v2116
        %v2246 = vmul.f32 %v2097, %v2120
        %v2247 = vmul.f32 %v2101, %v2116
        %v2248 = vmul.f32 %v2101, %v2120
        %v2249 = vadd.f32 %v1719, %v2121
        %v2250 = vadd.f32 %v1720, %v2122
        %v2251 = vadd.f32 %v1721, %v2123
        %v2252 = vadd.f32 %v1722, %v2124
        %v2253 = vadd.f32 %v1723, %v2125
        %v2254 = vadd.f32 %v1724, %v2126
        %v2255 = vadd.f32 %v1725, %v2127
        %v2256 = vadd.f32 %v1726, %v2128
        %v2257 = vadd.f32 %v1727, %v2129
        %v2258 = vadd.f32 %v1728, %v2130
        %v2259 = vadd.f32 %v1729, %v2131
        %v2260 = vadd.f32 %v1730, %v2132
        %v2261 = vadd.f32 %v1731, %v2133
        %v2262 = vadd.f32 %v1732, %v2134
        %v2263 = vadd.f32 %v1733, %v2135
        %v2264 = vadd.f32 %v1734, %v2136
        %v2265 = vadd.f32 %v1735, %v2137
        %v2266 = vadd.f32 %v1736, %v2138
        %v2267 = vadd.f32 %v1737, %v2139
        %v2268 = vadd.f32 %v1738, %v2140
        %v2269 = vadd.f32 %v1739, %v2141
        %v2270 = vadd.f32 %v1740, %v2142
        %v2271 = vadd.f32 %v1741, %v2143
        %v2272 = vadd.f32 %v1742, %v2144
        %v2273 = vadd.f32 %v1743, %v2145
        %v2274 = vadd.f32 %v1744, %v2146
        %v2275 = vadd.f32 %v1745, %v2147
        %v2276 = vadd.f32 %v1746, %v2148
        %v2277 = vadd.f32 %v1747, %v2149
        %v2278 = vadd.f32 %v1748, %v2150
        %v2279 = vadd.f32 %v1749, %v2151
        %v2280 = vadd.f32 %v1750, %v2152
        %v2281 = vadd.f32 %v1751, %v2153
        %v2282 = vadd.f32 %v1752, %v2154
        %v2283 = vadd.f32 %v1753, %v2155
        %v2284 = vadd.f32 %v1754, %v2156
        %v2285 = vadd.f32 %v1755, %v2157
        %v2286 = vadd.f32 %v1756, %v2158
        %v2287 = vadd.f32 %v1757, %v2159
        %v2288 = vadd.f32 %v1758, %v2160
        %v2289 = vadd.f32 %v1759, %v2161
        %v2290 = vadd.f32 %v1760, %v2162
        %v2291 = vadd.f32 %v1761, %v2163
        %v2292 = vadd.f32 %v1762, %v2164
        %v2293 = vadd.f32 %v1763, %v2165
        %v2294 = vadd.f32 %v1764, %v2166
        %v2295 = vadd.f32 %v1765, %v2167
        %v2296 = vadd.f32 %v1766, %v2168
        %v2297 = vadd.f32 %v1767, %v2169
        %v2298 = vadd.f32 %v1768, %v2170
        %v2299 = vadd.f32 %v1769, %v2171
        %v2300 = vadd.f32 %v1770, %v2172
        %v2301 = vadd.f32 %v1771, %v2173
        %v2302 = vadd.f32 %v1772, %v2174
        %v2303 = vadd.f32 %v1773, %v2175
        %v2304 = vadd.f32 %v1774, %v2176
        %v2305 = vadd.f32 %v1775, %v2177
        %v2306 = vadd.f32 %v1776, %v2178
        %v2307 = vadd.f32 %v1777, %v2179
        %v2308 = vadd.f32 %v1778, %v2180
        %v2309 = vadd.f32 %v1779, %v2181
        %v2310 = vadd.f32 %v1780, %v2182
        %v2311 = vadd.f32 %v1781, %v2183
        %v2312 = vadd.f32 %v1782, %v2184
        %v2313 = vadd.f32 %v1783, %v2185
        %v2314 = vadd.f32 %v1784, %v2186
        %v2315 = vadd.f32 %v1785, %v2187
        %v2316 = vadd.f32 %v1786, %v2188
        %v2317 = vadd.f32 %v1787, %v2189
        %v2318 = vadd.f32 %v1788, %v2190
        %v2319 = vadd.f32 %v1789, %v2191
        %v2320 = vadd.f32 %v1790, %v2192
        %v2321 = vadd.f32 %v1791, %v2193
        %v2322 = vadd.f32 %v1792, %v2194
        %v2323 = vadd.f32 %v1793, %v2195
        %v2324 = vadd.f32 %v1794, %v2196
        %v2325 = vadd.f32 %v1795, %v2197
        %v2326 = vadd.f32 %v1796, %v2198
        %v2327 = vadd.f32 %v1797, %v2199
        %v2328 = vadd.f32 %v1798, %v2200
        %v2329 = vadd.f32 %v1799, %v2201
        %v2330 = vadd.f32 %v1800, %v2202
        %v2331 = vadd.f32 %v1801, %v2203
        %v2332 = vadd.f32 %v1802, %v2204
        %v2333 = vadd.f32 %v1803, %v2205
        %v2334 = vadd.f32 %v1804, %v2206
        %v2335 = vadd.f32 %v1805, %v2207
        %v2336 = vadd.f32 %v1806, %v2208
        %v2337 = vadd.f32 %v1807, %v2209
        %v2338 = vadd.f32 %v1808, %v2210
        %v2339 = vadd.f32 %v1809, %v2211
        %v2340 = vadd.f32 %v1810, %v2212
        %v2341 = vadd.f32 %v1811, %v2213
        %v2342 = vadd.f32 %v1812, %v2214
        %v2343 = vadd.f32 %v1813, %v2215
        %v2344 = vadd.f32 %v1814, %v2216
        %v2345 = vadd.f32 %v1815, %v2217
        %v2346 = vadd.f32 %v1816, %v2218
        %v2347 = vadd.f32 %v1817, %v2219
        %v2348 = vadd.f32 %v1818, %v2220
        %v2349 = vadd.f32 %v1819, %v2221
        %v2350 = vadd.f32 %v1820, %v2222
        %v2351 = vadd.f32 %v1821, %v2223
        %v2352 = vadd.f32 %v1822, %v2224
        %v2353 = vadd.f32 %v1823, %v2225
        %v2354 = vadd.f32 %v1824, %v2226
        %v2355 = vadd.f32 %v1825, %v2227
        %v2356 = vadd.f32 %v1826, %v2228
        %v2357 = vadd.f32 %v1827, %v2229
        %v2358 = vadd.f32 %v1828, %v2230
        %v2359 = vadd.f32 %v1829, %v2231
        %v2360 = vadd.f32 %v1830, %v2232
        %v2361 = vadd.f32 %v1831, %v2233
        %v2362 = vadd.f32 %v1832, %v2234
        %v2363 = vadd.f32 %v1833, %v2235
        %v2364 = vadd.f32 %v1834, %v2236
        %v2365 = vadd.f32 %v1835, %v2237
        %v2366 = vadd.f32 %v1836, %v2238
        %v2367 = vadd.f32 %v1837, %v2239
        %v2368 = vadd.f32 %v1838, %v2240
        %v2369 = vadd.f32 %v1839, %v2241
        %v2370 = vadd.f32 %v1840, %v2242
        %v2371 = vadd.f32 %v1841, %v2243
        %v2372 = vadd.f32 %v1842, %v2244
        %v2373 = vadd.f32 %v1843, %v2245
        %v2374 = vadd.f32 %v1844, %v2246
        %v2375 = vadd.f32 %v1845, %v2247
        %v2376 = vadd.f32 %v1846, %v2248
        %v2377 = vld [vmem:[%s2] sm:$0xff]
        %v2378 = vld [vmem:[%s2 + $0x8] sm:$0xff]
        %v2379 = vld [vmem:[%s2 + $0x10] sm:$0xff]
        %v2380 = vld [vmem:[%s2 + $0x18] sm:$0xff]
        %v2381 = vld [vmem:[%s2 + $0x20] sm:$0xff]
        %v2382 = vld [vmem:[%s2 + $0x28] sm:$0xff]
        %v2383 = vld [vmem:[%s2 + $0x30] sm:$0xff]
        %v2384 = vld [vmem:[%s2 + $0x38] sm:$0xff]
        %v2385 = vld [vmem:[%s2 + $0x40] sm:$0xff]
        %v2386 = vld [vmem:[%s2 + $0x48] sm:$0xff]
        %v2387 = vld [vmem:[%s2 + $0x50] sm:$0xff]
        %v2388 = vld [vmem:[%s2 + $0x58] sm:$0xff]
        %v2389 = vld [vmem:[%s2 + $0x60] sm:$0xff]
        %v2390 = vld [vmem:[%s2 + $0x68] sm:$0xff]
        %v2391 = vld [vmem:[%s2 + $0x70] sm:$0xff]
        %v2392 = vld [vmem:[%s2 + $0x78] sm:$0xff]
        %v2393 = vld [vmem:[%s2 + $0x80] sm:$0xff]
        %v2394 = vld [vmem:[%s2 + $0x88] sm:$0xff]
        %v2395 = vld [vmem:[%s2 + $0x90] sm:$0xff]
        %v2396 = vld [vmem:[%s2 + $0x98] sm:$0xff]
        %v2397 = vld [vmem:[%s2 + $0xa0] sm:$0xff]
        %v2398 = vld [vmem:[%s2 + $0xa8] sm:$0xff]
        %v2399 = vld [vmem:[%s2 + $0xb0] sm:$0xff]
        %v2400 = vld [vmem:[%s2 + $0xb8] sm:$0xff]
        %v2401 = vld [vmem:[%s2 + $0xc0] sm:$0xff]
        %v2402 = vld [vmem:[%s2 + $0xc8] sm:$0xff]
        %v2403 = vld [vmem:[%s2 + $0xd0] sm:$0xff]
        %v2404 = vld [vmem:[%s2 + $0xd8] sm:$0xff]
        %v2405 = vld [vmem:[%s2 + $0xe0] sm:$0xff]
        %v2406 = vld [vmem:[%s2 + $0xe8] sm:$0xff]
        %v2407 = vld [vmem:[%s2 + $0xf0] sm:$0xff]
        %v2408 = vld [vmem:[%s2 + $0xf8] sm:$0xff]
        %v2409 = vld [vmem:[%s2 + $0x100] sm:$0xff]
        %v2410 = vld [vmem:[%s2 + $0x108] sm:$0xff]
        %v2411 = vld [vmem:[%s2 + $0x110] sm:$0xff]
        %v2412 = vld [vmem:[%s2 + $0x118] sm:$0xff]
        %v2413 = vld [vmem:[%s2 + $0x120] sm:$0xff]
        %v2414 = vld [vmem:[%s2 + $0x128] sm:$0xff]
        %v2415 = vld [vmem:[%s2 + $0x130] sm:$0xff]
        %v2416 = vld [vmem:[%s2 + $0x138] sm:$0xff]
        %v2417 = vld [vmem:[%s2 + $0x140] sm:$0xff]
        %v2418 = vld [vmem:[%s2 + $0x148] sm:$0xff]
        %v2419 = vld [vmem:[%s2 + $0x150] sm:$0xff]
        %v2420 = vld [vmem:[%s2 + $0x158] sm:$0xff]
        %v2421 = vld [vmem:[%s2 + $0x160] sm:$0xff]
        %v2422 = vld [vmem:[%s2 + $0x168] sm:$0xff]
        %v2423 = vld [vmem:[%s2 + $0x170] sm:$0xff]
        %v2424 = vld [vmem:[%s2 + $0x178] sm:$0xff]
        %v2425 = vld [vmem:[%s2 + $0x180] sm:$0xff]
        %v2426 = vld [vmem:[%s2 + $0x188] sm:$0xff]
        %v2427 = vld [vmem:[%s2 + $0x190] sm:$0xff]
        %v2428 = vld [vmem:[%s2 + $0x198] sm:$0xff]
        %v2429 = vld [vmem:[%s2 + $0x1a0] sm:$0xff]
        %v2430 = vld [vmem:[%s2 + $0x1a8] sm:$0xff]
        %v2431 = vld [vmem:[%s2 + $0x1b0] sm:$0xff]
        %v2432 = vld [vmem:[%s2 + $0x1b8] sm:$0xff]
        %v2433 = vld [vmem:[%s2 + $0x1c0] sm:$0xff]
        %v2434 = vld [vmem:[%s2 + $0x1c8] sm:$0xff]
        %v2435 = vld [vmem:[%s2 + $0x1d0] sm:$0xff]
        %v2436 = vld [vmem:[%s2 + $0x1d8] sm:$0xff]
        %v2437 = vld [vmem:[%s2 + $0x1e0] sm:$0xff]
        %v2438 = vld [vmem:[%s2 + $0x1e8] sm:$0xff]
        %v2439 = vld [vmem:[%s2 + $0x1f0] sm:$0xff]
        %v2440 = vld [vmem:[%s2 + $0x1f8] sm:$0xff]
        %2442 = vset.pattern.permute.xlu0 0
        %2443 = vperm.xlu0 %2442, %v2377
        %v2444 = vpop.permute.xlu0 %2443
        %2447 = vset.pattern.permute.xlu0 0
        %2448 = vperm.xlu0 %2447, %v2378
        %v2449 = vpop.permute.xlu0 %2448
        %2452 = vset.pattern.permute.xlu0 0
        %2453 = vperm.xlu0 %2452, %v2379
        %v2454 = vpop.permute.xlu0 %2453
        %2457 = vset.pattern.permute.xlu0 0
        %2458 = vperm.xlu0 %2457, %v2380
        %v2459 = vpop.permute.xlu0 %2458
        %2462 = vset.pattern.permute.xlu0 0
        %2463 = vperm.xlu0 %2462, %v2381
        %v2464 = vpop.permute.xlu0 %2463
        %2467 = vset.pattern.permute.xlu0 0
        %2468 = vperm.xlu0 %2467, %v2382
        %v2469 = vpop.permute.xlu0 %2468
        %2472 = vset.pattern.permute.xlu0 0
        %2473 = vperm.xlu0 %2472, %v2383
        %v2474 = vpop.permute.xlu0 %2473
        %2477 = vset.pattern.permute.xlu0 0
        %2478 = vperm.xlu0 %2477, %v2384
        %v2479 = vpop.permute.xlu0 %2478
        %2482 = vset.pattern.permute.xlu0 0
        %2483 = vperm.xlu0 %2482, %v2385
        %v2484 = vpop.permute.xlu0 %2483
        %2487 = vset.pattern.permute.xlu0 0
        %2488 = vperm.xlu0 %2487, %v2386
        %v2489 = vpop.permute.xlu0 %2488
        %2492 = vset.pattern.permute.xlu0 0
        %2493 = vperm.xlu0 %2492, %v2387
        %v2494 = vpop.permute.xlu0 %2493
        %2497 = vset.pattern.permute.xlu0 0
        %2498 = vperm.xlu0 %2497, %v2388
        %v2499 = vpop.permute.xlu0 %2498
        %2502 = vset.pattern.permute.xlu0 0
        %2503 = vperm.xlu0 %2502, %v2389
        %v2504 = vpop.permute.xlu0 %2503
        %2507 = vset.pattern.permute.xlu0 0
        %2508 = vperm.xlu0 %2507, %v2390
        %v2509 = vpop.permute.xlu0 %2508
        %2512 = vset.pattern.permute.xlu0 0
        %2513 = vperm.xlu0 %2512, %v2391
        %v2514 = vpop.permute.xlu0 %2513
        %2517 = vset.pattern.permute.xlu0 0
        %2518 = vperm.xlu0 %2517, %v2392
        %v2519 = vpop.permute.xlu0 %2518
        %2522 = vset.pattern.permute.xlu0 0
        %2523 = vperm.xlu0 %2522, %v2393
        %v2524 = vpop.permute.xlu0 %2523
        %2527 = vset.pattern.permute.xlu0 0
        %2528 = vperm.xlu0 %2527, %v2394
        %v2529 = vpop.permute.xlu0 %2528
        %2532 = vset.pattern.permute.xlu0 0
        %2533 = vperm.xlu0 %2532, %v2395
        %v2534 = vpop.permute.xlu0 %2533
        %2537 = vset.pattern.permute.xlu0 0
        %2538 = vperm.xlu0 %2537, %v2396
        %v2539 = vpop.permute.xlu0 %2538
        %2542 = vset.pattern.permute.xlu0 0
        %2543 = vperm.xlu0 %2542, %v2397
        %v2544 = vpop.permute.xlu0 %2543
        %2547 = vset.pattern.permute.xlu0 0
        %2548 = vperm.xlu0 %2547, %v2398
        %v2549 = vpop.permute.xlu0 %2548
        %2552 = vset.pattern.permute.xlu0 0
        %2553 = vperm.xlu0 %2552, %v2399
        %v2554 = vpop.permute.xlu0 %2553
        %2557 = vset.pattern.permute.xlu0 0
        %2558 = vperm.xlu0 %2557, %v2400
        %v2559 = vpop.permute.xlu0 %2558
        %2562 = vset.pattern.permute.xlu0 0
        %2563 = vperm.xlu0 %2562, %v2401
        %v2564 = vpop.permute.xlu0 %2563
        %2567 = vset.pattern.permute.xlu0 0
        %2568 = vperm.xlu0 %2567, %v2402
        %v2569 = vpop.permute.xlu0 %2568
        %2572 = vset.pattern.permute.xlu0 0
        %2573 = vperm.xlu0 %2572, %v2403
        %v2574 = vpop.permute.xlu0 %2573
        %2577 = vset.pattern.permute.xlu0 0
        %2578 = vperm.xlu0 %2577, %v2404
        %v2579 = vpop.permute.xlu0 %2578
        %2582 = vset.pattern.permute.xlu0 0
        %2583 = vperm.xlu0 %2582, %v2405
        %v2584 = vpop.permute.xlu0 %2583
        %2587 = vset.pattern.permute.xlu0 0
        %2588 = vperm.xlu0 %2587, %v2406
        %v2589 = vpop.permute.xlu0 %2588
        %2592 = vset.pattern.permute.xlu0 0
        %2593 = vperm.xlu0 %2592, %v2407
        %v2594 = vpop.permute.xlu0 %2593
        %2597 = vset.pattern.permute.xlu0 0
        %2598 = vperm.xlu0 %2597, %v2408
        %v2599 = vpop.permute.xlu0 %2598
        %2602 = vset.pattern.permute.xlu0 0
        %2603 = vperm.xlu0 %2602, %v2409
        %v2604 = vpop.permute.xlu0 %2603
        %2607 = vset.pattern.permute.xlu0 0
        %2608 = vperm.xlu0 %2607, %v2410
        %v2609 = vpop.permute.xlu0 %2608
        %2612 = vset.pattern.permute.xlu0 0
        %2613 = vperm.xlu0 %2612, %v2411
        %v2614 = vpop.permute.xlu0 %2613
        %2617 = vset.pattern.permute.xlu0 0
        %2618 = vperm.xlu0 %2617, %v2412
        %v2619 = vpop.permute.xlu0 %2618
        %2622 = vset.pattern.permute.xlu0 0
        %2623 = vperm.xlu0 %2622, %v2413
        %v2624 = vpop.permute.xlu0 %2623
        %2627 = vset.pattern.permute.xlu0 0
        %2628 = vperm.xlu0 %2627, %v2414
        %v2629 = vpop.permute.xlu0 %2628
        %2632 = vset.pattern.permute.xlu0 0
        %2633 = vperm.xlu0 %2632, %v2415
        %v2634 = vpop.permute.xlu0 %2633
        %2637 = vset.pattern.permute.xlu0 0
        %2638 = vperm.xlu0 %2637, %v2416
        %v2639 = vpop.permute.xlu0 %2638
        %2642 = vset.pattern.permute.xlu0 0
        %2643 = vperm.xlu0 %2642, %v2417
        %v2644 = vpop.permute.xlu0 %2643
        %2647 = vset.pattern.permute.xlu0 0
        %2648 = vperm.xlu0 %2647, %v2418
        %v2649 = vpop.permute.xlu0 %2648
        %2652 = vset.pattern.permute.xlu0 0
        %2653 = vperm.xlu0 %2652, %v2419
        %v2654 = vpop.permute.xlu0 %2653
        %2657 = vset.pattern.permute.xlu0 0
        %2658 = vperm.xlu0 %2657, %v2420
        %v2659 = vpop.permute.xlu0 %2658
        %2662 = vset.pattern.permute.xlu0 0
        %2663 = vperm.xlu0 %2662, %v2421
        %v2664 = vpop.permute.xlu0 %2663
        %2667 = vset.pattern.permute.xlu0 0
        %2668 = vperm.xlu0 %2667, %v2422
        %v2669 = vpop.permute.xlu0 %2668
        %2672 = vset.pattern.permute.xlu0 0
        %2673 = vperm.xlu0 %2672, %v2423
        %v2674 = vpop.permute.xlu0 %2673
        %2677 = vset.pattern.permute.xlu0 0
        %2678 = vperm.xlu0 %2677, %v2424
        %v2679 = vpop.permute.xlu0 %2678
        %2682 = vset.pattern.permute.xlu0 0
        %2683 = vperm.xlu0 %2682, %v2425
        %v2684 = vpop.permute.xlu0 %2683
        %2687 = vset.pattern.permute.xlu0 0
        %2688 = vperm.xlu0 %2687, %v2426
        %v2689 = vpop.permute.xlu0 %2688
        %2692 = vset.pattern.permute.xlu0 0
        %2693 = vperm.xlu0 %2692, %v2427
        %v2694 = vpop.permute.xlu0 %2693
        %2697 = vset.pattern.permute.xlu0 0
        %2698 = vperm.xlu0 %2697, %v2428
        %v2699 = vpop.permute.xlu0 %2698
        %2702 = vset.pattern.permute.xlu0 0
        %2703 = vperm.xlu0 %2702, %v2429
        %v2704 = vpop.permute.xlu0 %2703
        %2707 = vset.pattern.permute.xlu0 0
        %2708 = vperm.xlu0 %2707, %v2430
        %v2709 = vpop.permute.xlu0 %2708
        %2712 = vset.pattern.permute.xlu0 0
        %2713 = vperm.xlu0 %2712, %v2431
        %v2714 = vpop.permute.xlu0 %2713
        %2717 = vset.pattern.permute.xlu0 0
        %2718 = vperm.xlu0 %2717, %v2432
        %v2719 = vpop.permute.xlu0 %2718
        %2722 = vset.pattern.permute.xlu0 0
        %2723 = vperm.xlu0 %2722, %v2433
        %v2724 = vpop.permute.xlu0 %2723
        %2727 = vset.pattern.permute.xlu0 0
        %2728 = vperm.xlu0 %2727, %v2434
        %v2729 = vpop.permute.xlu0 %2728
        %2732 = vset.pattern.permute.xlu0 0
        %2733 = vperm.xlu0 %2732, %v2435
        %v2734 = vpop.permute.xlu0 %2733
        %2737 = vset.pattern.permute.xlu0 0
        %2738 = vperm.xlu0 %2737, %v2436
        %v2739 = vpop.permute.xlu0 %2738
        %2742 = vset.pattern.permute.xlu0 0
        %2743 = vperm.xlu0 %2742, %v2437
        %v2744 = vpop.permute.xlu0 %2743
        %2747 = vset.pattern.permute.xlu0 0
        %2748 = vperm.xlu0 %2747, %v2438
        %v2749 = vpop.permute.xlu0 %2748
        %2752 = vset.pattern.permute.xlu0 0
        %2753 = vperm.xlu0 %2752, %v2439
        %v2754 = vpop.permute.xlu0 %2753
        %2757 = vset.pattern.permute.xlu0 0
        %2758 = vperm.xlu0 %2757, %v2440
        %v2759 = vpop.permute.xlu0 %2758
        %v2761 = vadd.f32 %v2249, %v2444
        %v2762 = vadd.f32 %v2250, %v2444
        %v2763 = vadd.f32 %v2251, %v2449
        %v2764 = vadd.f32 %v2252, %v2449
        %v2765 = vadd.f32 %v2253, %v2454
        %v2766 = vadd.f32 %v2254, %v2454
        %v2767 = vadd.f32 %v2255, %v2459
        %v2768 = vadd.f32 %v2256, %v2459
        %v2769 = vadd.f32 %v2257, %v2464
        %v2770 = vadd.f32 %v2258, %v2464
        %v2771 = vadd.f32 %v2259, %v2469
        %v2772 = vadd.f32 %v2260, %v2469
        %v2773 = vadd.f32 %v2261, %v2474
        %v2774 = vadd.f32 %v2262, %v2474
        %v2775 = vadd.f32 %v2263, %v2479
        %v2776 = vadd.f32 %v2264, %v2479
        %v2777 = vadd.f32 %v2265, %v2484
        %v2778 = vadd.f32 %v2266, %v2484
        %v2779 = vadd.f32 %v2267, %v2489
        %v2780 = vadd.f32 %v2268, %v2489
        %v2781 = vadd.f32 %v2269, %v2494
        %v2782 = vadd.f32 %v2270, %v2494
        %v2783 = vadd.f32 %v2271, %v2499
        %v2784 = vadd.f32 %v2272, %v2499
        %v2785 = vadd.f32 %v2273, %v2504
        %v2786 = vadd.f32 %v2274, %v2504
        %v2787 = vadd.f32 %v2275, %v2509
        %v2788 = vadd.f32 %v2276, %v2509
        %v2789 = vadd.f32 %v2277, %v2514
        %v2790 = vadd.f32 %v2278, %v2514
        %v2791 = vadd.f32 %v2279, %v2519
        %v2792 = vadd.f32 %v2280, %v2519
        %v2793 = vadd.f32 %v2281, %v2524
        %v2794 = vadd.f32 %v2282, %v2524
        %v2795 = vadd.f32 %v2283, %v2529
        %v2796 = vadd.f32 %v2284, %v2529
        %v2797 = vadd.f32 %v2285, %v2534
        %v2798 = vadd.f32 %v2286, %v2534
        %v2799 = vadd.f32 %v2287, %v2539
        %v2800 = vadd.f32 %v2288, %v2539
        %v2801 = vadd.f32 %v2289, %v2544
        %v2802 = vadd.f32 %v2290, %v2544
        %v2803 = vadd.f32 %v2291, %v2549
        %v2804 = vadd.f32 %v2292, %v2549
        %v2805 = vadd.f32 %v2293, %v2554
        %v2806 = vadd.f32 %v2294, %v2554
        %v2807 = vadd.f32 %v2295, %v2559
        %v2808 = vadd.f32 %v2296, %v2559
        %v2809 = vadd.f32 %v2297, %v2564
        %v2810 = vadd.f32 %v2298, %v2564
        %v2811 = vadd.f32 %v2299, %v2569
        %v2812 = vadd.f32 %v2300, %v2569
        %v2813 = vadd.f32 %v2301, %v2574
        %v2814 = vadd.f32 %v2302, %v2574
        %v2815 = vadd.f32 %v2303, %v2579
        %v2816 = vadd.f32 %v2304, %v2579
        %v2817 = vadd.f32 %v2305, %v2584
        %v2818 = vadd.f32 %v2306, %v2584
        %v2819 = vadd.f32 %v2307, %v2589
        %v2820 = vadd.f32 %v2308, %v2589
        %v2821 = vadd.f32 %v2309, %v2594
        %v2822 = vadd.f32 %v2310, %v2594
        %v2823 = vadd.f32 %v2311, %v2599
        %v2824 = vadd.f32 %v2312, %v2599
        %v2825 = vadd.f32 %v2313, %v2604
        %v2826 = vadd.f32 %v2314, %v2604
        %v2827 = vadd.f32 %v2315, %v2609
        %v2828 = vadd.f32 %v2316, %v2609
        %v2829 = vadd.f32 %v2317, %v2614
        %v2830 = vadd.f32 %v2318, %v2614
        %v2831 = vadd.f32 %v2319, %v2619
        %v2832 = vadd.f32 %v2320, %v2619
        %v2833 = vadd.f32 %v2321, %v2624
        %v2834 = vadd.f32 %v2322, %v2624
        %v2835 = vadd.f32 %v2323, %v2629
        %v2836 = vadd.f32 %v2324, %v2629
        %v2837 = vadd.f32 %v2325, %v2634
        %v2838 = vadd.f32 %v2326, %v2634
        %v2839 = vadd.f32 %v2327, %v2639
        %v2840 = vadd.f32 %v2328, %v2639
        %v2841 = vadd.f32 %v2329, %v2644
        %v2842 = vadd.f32 %v2330, %v2644
        %v2843 = vadd.f32 %v2331, %v2649
        %v2844 = vadd.f32 %v2332, %v2649
        %v2845 = vadd.f32 %v2333, %v2654
        %v2846 = vadd.f32 %v2334, %v2654
        %v2847 = vadd.f32 %v2335, %v2659
        %v2848 = vadd.f32 %v2336, %v2659
        %v2849 = vadd.f32 %v2337, %v2664
        %v2850 = vadd.f32 %v2338, %v2664
        %v2851 = vadd.f32 %v2339, %v2669
        %v2852 = vadd.f32 %v2340, %v2669
        %v2853 = vadd.f32 %v2341, %v2674
        %v2854 = vadd.f32 %v2342, %v2674
        %v2855 = vadd.f32 %v2343, %v2679
        %v2856 = vadd.f32 %v2344, %v2679
        %v2857 = vadd.f32 %v2345, %v2684
        %v2858 = vadd.f32 %v2346, %v2684
        %v2859 = vadd.f32 %v2347, %v2689
        %v2860 = vadd.f32 %v2348, %v2689
        %v2861 = vadd.f32 %v2349, %v2694
        %v2862 = vadd.f32 %v2350, %v2694
        %v2863 = vadd.f32 %v2351, %v2699
        %v2864 = vadd.f32 %v2352, %v2699
        %v2865 = vadd.f32 %v2353, %v2704
        %v2866 = vadd.f32 %v2354, %v2704
        %v2867 = vadd.f32 %v2355, %v2709
        %v2868 = vadd.f32 %v2356, %v2709
        %v2869 = vadd.f32 %v2357, %v2714
        %v2870 = vadd.f32 %v2358, %v2714
        %v2871 = vadd.f32 %v2359, %v2719
        %v2872 = vadd.f32 %v2360, %v2719
        %v2873 = vadd.f32 %v2361, %v2724
        %v2874 = vadd.f32 %v2362, %v2724
        %v2875 = vadd.f32 %v2363, %v2729
        %v2876 = vadd.f32 %v2364, %v2729
        %v2877 = vadd.f32 %v2365, %v2734
        %v2878 = vadd.f32 %v2366, %v2734
        %v2879 = vadd.f32 %v2367, %v2739
        %v2880 = vadd.f32 %v2368, %v2739
        %v2881 = vadd.f32 %v2369, %v2744
        %v2882 = vadd.f32 %v2370, %v2744
        %v2883 = vadd.f32 %v2371, %v2749
        %v2884 = vadd.f32 %v2372, %v2749
        %v2885 = vadd.f32 %v2373, %v2754
        %v2886 = vadd.f32 %v2374, %v2754
        %v2887 = vadd.f32 %v2375, %v2759
        %v2888 = vadd.f32 %v2376, %v2759
        %v2889 = vmax.f32 %v2761, 0.0
        %v2890 = vmax.f32 %v2762, 0.0
        %v2891 = vmax.f32 %v2763, 0.0
        %v2892 = vmax.f32 %v2764, 0.0
        %v2893 = vmax.f32 %v2765, 0.0
        %v2894 = vmax.f32 %v2766, 0.0
        %v2895 = vmax.f32 %v2767, 0.0
        %v2896 = vmax.f32 %v2768, 0.0
        %v2897 = vmax.f32 %v2769, 0.0
        %v2898 = vmax.f32 %v2770, 0.0
        %v2899 = vmax.f32 %v2771, 0.0
        %v2900 = vmax.f32 %v2772, 0.0
        %v2901 = vmax.f32 %v2773, 0.0
        %v2902 = vmax.f32 %v2774, 0.0
        %v2903 = vmax.f32 %v2775, 0.0
        %v2904 = vmax.f32 %v2776, 0.0
        %v2905 = vmax.f32 %v2777, 0.0
        %v2906 = vmax.f32 %v2778, 0.0
        %v2907 = vmax.f32 %v2779, 0.0
        %v2908 = vmax.f32 %v2780, 0.0
        %v2909 = vmax.f32 %v2781, 0.0
        %v2910 = vmax.f32 %v2782, 0.0
        %v2911 = vmax.f32 %v2783, 0.0
        %v2912 = vmax.f32 %v2784, 0.0
        %v2913 = vmax.f32 %v2785, 0.0
        %v2914 = vmax.f32 %v2786, 0.0
        %v2915 = vmax.f32 %v2787, 0.0
        %v2916 = vmax.f32 %v2788, 0.0
        %v2917 = vmax.f32 %v2789, 0.0
        %v2918 = vmax.f32 %v2790, 0.0
        %v2919 = vmax.f32 %v2791, 0.0
        %v2920 = vmax.f32 %v2792, 0.0
        %v2921 = vmax.f32 %v2793, 0.0
        %v2922 = vmax.f32 %v2794, 0.0
        %v2923 = vmax.f32 %v2795, 0.0
        %v2924 = vmax.f32 %v2796, 0.0
        %v2925 = vmax.f32 %v2797, 0.0
        %v2926 = vmax.f32 %v2798, 0.0
        %v2927 = vmax.f32 %v2799, 0.0
        %v2928 = vmax.f32 %v2800, 0.0
        %v2929 = vmax.f32 %v2801, 0.0
        %v2930 = vmax.f32 %v2802, 0.0
        %v2931 = vmax.f32 %v2803, 0.0
        %v2932 = vmax.f32 %v2804, 0.0
        %v2933 = vmax.f32 %v2805, 0.0
        %v2934 = vmax.f32 %v2806, 0.0
        %v2935 = vmax.f32 %v2807, 0.0
        %v2936 = vmax.f32 %v2808, 0.0
        %v2937 = vmax.f32 %v2809, 0.0
        %v2938 = vmax.f32 %v2810, 0.0
        %v2939 = vmax.f32 %v2811, 0.0
        %v2940 = vmax.f32 %v2812, 0.0
        %v2941 = vmax.f32 %v2813, 0.0
        %v2942 = vmax.f32 %v2814, 0.0
        %v2943 = vmax.f32 %v2815, 0.0
        %v2944 = vmax.f32 %v2816, 0.0
        %v2945 = vmax.f32 %v2817, 0.0
        %v2946 = vmax.f32 %v2818, 0.0
        %v2947 = vmax.f32 %v2819, 0.0
        %v2948 = vmax.f32 %v2820, 0.0
        %v2949 = vmax.f32 %v2821, 0.0
        %v2950 = vmax.f32 %v2822, 0.0
        %v2951 = vmax.f32 %v2823, 0.0
        %v2952 = vmax.f32 %v2824, 0.0
        %v2953 = vmax.f32 %v2825, 0.0
        %v2954 = vmax.f32 %v2826, 0.0
        %v2955 = vmax.f32 %v2827, 0.0
        %v2956 = vmax.f32 %v2828, 0.0
        %v2957 = vmax.f32 %v2829, 0.0
        %v2958 = vmax.f32 %v2830, 0.0
        %v2959 = vmax.f32 %v2831, 0.0
        %v2960 = vmax.f32 %v2832, 0.0
        %v2961 = vmax.f32 %v2833, 0.0
        %v2962 = vmax.f32 %v2834, 0.0
        %v2963 = vmax.f32 %v2835, 0.0
        %v2964 = vmax.f32 %v2836, 0.0
        %v2965 = vmax.f32 %v2837, 0.0
        %v2966 = vmax.f32 %v2838, 0.0
        %v2967 = vmax.f32 %v2839, 0.0
        %v2968 = vmax.f32 %v2840, 0.0
        %v2969 = vmax.f32 %v2841, 0.0
        %v2970 = vmax.f32 %v2842, 0.0
        %v2971 = vmax.f32 %v2843, 0.0
        %v2972 = vmax.f32 %v2844, 0.0
        %v2973 = vmax.f32 %v2845, 0.0
        %v2974 = vmax.f32 %v2846, 0.0
        %v2975 = vmax.f32 %v2847, 0.0
        %v2976 = vmax.f32 %v2848, 0.0
        %v2977 = vmax.f32 %v2849, 0.0
        %v2978 = vmax.f32 %v2850, 0.0
        %v2979 = vmax.f32 %v2851, 0.0
        %v2980 = vmax.f32 %v2852, 0.0
        %v2981 = vmax.f32 %v2853, 0.0
        %v2982 = vmax.f32 %v2854, 0.0
        %v2983 = vmax.f32 %v2855, 0.0
        %v2984 = vmax.f32 %v2856, 0.0
        %v2985 = vmax.f32 %v2857, 0.0
        %v2986 = vmax.f32 %v2858, 0.0
        %v2987 = vmax.f32 %v2859, 0.0
        %v2988 = vmax.f32 %v2860, 0.0
        %v2989 = vmax.f32 %v2861, 0.0
        %v2990 = vmax.f32 %v2862, 0.0
        %v2991 = vmax.f32 %v2863, 0.0
        %v2992 = vmax.f32 %v2864, 0.0
        %v2993 = vmax.f32 %v2865, 0.0
        %v2994 = vmax.f32 %v2866, 0.0
        %v2995 = vmax.f32 %v2867, 0.0
        %v2996 = vmax.f32 %v2868, 0.0
        %v2997 = vmax.f32 %v2869, 0.0
        %v2998 = vmax.f32 %v2870, 0.0
        %v2999 = vmax.f32 %v2871, 0.0
        %v3000 = vmax.f32 %v2872, 0.0
        %v3001 = vmax.f32 %v2873, 0.0
        %v3002 = vmax.f32 %v2874, 0.0
        %v3003 = vmax.f32 %v2875, 0.0
        %v3004 = vmax.f32 %v2876, 0.0
        %v3005 = vmax.f32 %v2877, 0.0
        %v3006 = vmax.f32 %v2878, 0.0
        %v3007 = vmax.f32 %v2879, 0.0
        %v3008 = vmax.f32 %v2880, 0.0
        %v3009 = vmax.f32 %v2881, 0.0
        %v3010 = vmax.f32 %v2882, 0.0
        %v3011 = vmax.f32 %v2883, 0.0
        %v3012 = vmax.f32 %v2884, 0.0
        %v3013 = vmax.f32 %v2885, 0.0
        %v3014 = vmax.f32 %v2886, 0.0
        %v3015 = vmax.f32 %v2887, 0.0
        %v3016 = vmax.f32 %v2888, 0.0
        %v3017 = vld [vmem:[%s3] sm:$0xff]
        %v3018 = vld [vmem:[%s3 + $0x8] sm:$0xff]
        %v3019 = vld [vmem:[%s3 + $0x10] sm:$0xff]
        %v3020 = vld [vmem:[%s3 + $0x18] sm:$0xff]
        %v3021 = vld [vmem:[%s4] sm:$0xff]
        %3023 = vset.pattern.permute.xlu0 0
        %3024 = vperm.xlu0 %3023, %v3021
        %v3025 = vpop.permute.xlu0 %3024
        %3027 = vmatprep.subr.mxu0 %v2890
        %3028 = vmatpush1.msra.mxu0 %v2889
        %3029 = vmatprep.subr.mxu0 %v2892
        %3030 = vmatpush1.msra.mxu0 %v2891
        %3031 = vmatprep.subr.mxu0 %v2894
        %3032 = vmatpush1.msra.mxu0 %v2893
        %3033 = vmatprep.subr.mxu0 %v2896
        %3034 = vmatpush1.msra.mxu0 %v2895
        %3035 = vmatprep.subr.mxu0 %v2898
        %3036 = vmatpush1.msra.mxu0 %v2897
        %3037 = vmatprep.subr.mxu0 %v2900
        %3038 = vmatpush1.msra.mxu0 %v2899
        %3039 = vmatprep.subr.mxu0 %v2902
        %3040 = vmatpush1.msra.mxu0 %v2901
        %3041 = vmatprep.subr.mxu0 %v2904
        %3042 = vmatpush1.msra.mxu0 %v2903
        %3043 = vmatprep.subr.mxu0 %v2906
        %3044 = vmatpush1.msra.mxu0 %v2905
        %3045 = vmatprep.subr.mxu0 %v2908
        %3046 = vmatpush1.msra.mxu0 %v2907
        %3047 = vmatprep.subr.mxu0 %v2910
        %3048 = vmatpush1.msra.mxu0 %v2909
        %3049 = vmatprep.subr.mxu0 %v2912
        %3050 = vmatpush1.msra.mxu0 %v2911
        %3051 = vmatprep.subr.mxu0 %v2914
        %3052 = vmatpush1.msra.mxu0 %v2913
        %3053 = vmatprep.subr.mxu0 %v2916
        %3054 = vmatpush1.msra.mxu0 %v2915
        %3055 = vmatprep.subr.mxu0 %v2918
        %3056 = vmatpush1.msra.mxu0 %v2917
        %3057 = vmatprep.subr.mxu0 %v2920
        %3058 = vmatpush1.msra.mxu0 %v2919
        %3059 = vmatprep.subr.mxu0 %v2922
        %3060 = vmatpush1.msra.mxu0 %v2921
        %3061 = vmatprep.subr.mxu0 %v2924
        %3062 = vmatpush1.msra.mxu0 %v2923
        %3063 = vmatprep.subr.mxu0 %v2926
        %3064 = vmatpush1.msra.mxu0 %v2925
        %3065 = vmatprep.subr.mxu0 %v2928
        %3066 = vmatpush1.msra.mxu0 %v2927
        %3067 = vmatprep.subr.mxu0 %v2930
        %3068 = vmatpush1.msra.mxu0 %v2929
        %3069 = vmatprep.subr.mxu0 %v2932
        %3070 = vmatpush1.msra.mxu0 %v2931
        %3071 = vmatprep.subr.mxu0 %v2934
        %3072 = vmatpush1.msra.mxu0 %v2933
        %3073 = vmatprep.subr.mxu0 %v2936
        %3074 = vmatpush1.msra.mxu0 %v2935
        %3075 = vmatprep.subr.mxu0 %v2938
        %3076 = vmatpush1.msra.mxu0 %v2937
        %3077 = vmatprep.subr.mxu0 %v2940
        %3078 = vmatpush1.msra.mxu0 %v2939
        %3079 = vmatprep.subr.mxu0 %v2942
        %3080 = vmatpush1.msra.mxu0 %v2941
        %3081 = vmatprep.subr.mxu0 %v2944
        %3082 = vmatpush1.msra.mxu0 %v2943
        %3083 = vmatprep.subr.mxu0 %v2946
        %3084 = vmatpush1.msra.mxu0 %v2945
        %3085 = vmatprep.subr.mxu0 %v2948
        %3086 = vmatpush1.msra.mxu0 %v2947
        %3087 = vmatprep.subr.mxu0 %v2950
        %3088 = vmatpush1.msra.mxu0 %v2949
        %3089 = vmatprep.subr.mxu0 %v2952
        %3090 = vmatpush1.msra.mxu0 %v2951
        %3091 = vmatprep.mubr.f32.mxu0 %v3018
        %3092 = vmatmul.mubr.f32.gmra.mrb[0].mxu0 %v3017
        %v3093 = vpop.f32.mrb[0].mxu0
        %v3094 = vadd.f32 %v3025, %v3093
        %v3095 = vpop.f32.mrb[0].mxu0
        %v3096 = vadd.f32 %v3025, %v3095
        %3097 = vdwg.mxu0
        %3098 = vmatprep.subr.mxu0 %v2954
        %3099 = vmatpush1.msra.mxu0 %v2953
        %3100 = vmatprep.subr.mxu0 %v2956
        %3101 = vmatpush1.msra.mxu0 %v2955
        %3102 = vmatprep.subr.mxu0 %v2958
        %3103 = vmatpush1.msra.mxu0 %v2957
        %3104 = vmatprep.subr.mxu0 %v2960
        %3105 = vmatpush1.msra.mxu0 %v2959
        %3106 = vmatprep.subr.mxu0 %v2962
        %3107 = vmatpush1.msra.mxu0 %v2961
        %3108 = vmatprep.subr.mxu0 %v2964
        %3109 = vmatpush1.msra.mxu0 %v2963
        %3110 = vmatprep.subr.mxu0 %v2966
        %3111 = vmatpush1.msra.mxu0 %v2965
        %3112 = vmatprep.subr.mxu0 %v2968
        %3113 = vmatpush1.msra.mxu0 %v2967
        %3114 = vmatprep.subr.mxu0 %v2970
        %3115 = vmatpush1.msra.mxu0 %v2969
        %3116 = vmatprep.subr.mxu0 %v2972
        %3117 = vmatpush1.msra.mxu0 %v2971
        %3118 = vmatprep.subr.mxu0 %v2974
        %3119 = vmatpush1.msra.mxu0 %v2973
        %3120 = vmatprep.subr.mxu0 %v2976
        %3121 = vmatpush1.msra.mxu0 %v2975
        %3122 = vmatprep.subr.mxu0 %v2978
        %3123 = vmatpush1.msra.mxu0 %v2977
        %3124 = vmatprep.subr.mxu0 %v2980
        %3125 = vmatpush1.msra.mxu0 %v2979
        %3126 = vmatprep.subr.mxu0 %v2982
        %3127 = vmatpush1.msra.mxu0 %v2981
        %3128 = vmatprep.subr.mxu0 %v2984
        %3129 = vmatpush1.msra.mxu0 %v2983
        %3130 = vmatprep.subr.mxu0 %v2986
        %3131 = vmatpush1.msra.mxu0 %v2985
        %3132 = vmatprep.subr.mxu0 %v2988
        %3133 = vmatpush1.msra.mxu0 %v2987
        %3134 = vmatprep.subr.mxu0 %v2990
        %3135 = vmatpush1.msra.mxu0 %v2989
        %3136 = vmatprep.subr.mxu0 %v2992
        %3137 = vmatpush1.msra.mxu0 %v2991
        %3138 = vmatprep.subr.mxu0 %v2994
        %3139 = vmatpush1.msra.mxu0 %v2993
        %3140 = vmatprep.subr.mxu0 %v2996
        %3141 = vmatpush1.msra.mxu0 %v2995
        %3142 = vmatprep.subr.mxu0 %v2998
        %3143 = vmatpush1.msra.mxu0 %v2997
        %3144 = vmatprep.subr.mxu0 %v3000
        %3145 = vmatpush1.msra.mxu0 %v2999
        %3146 = vmatprep.subr.mxu0 %v3002
        %3147 = vmatpush1.msra.mxu0 %v3001
        %3148 = vmatprep.subr.mxu0 %v3004
        %3149 = vmatpush1.msra.mxu0 %v3003
        %3150 = vmatprep.subr.mxu0 %v3006
        %3151 = vmatpush1.msra.mxu0 %v3005
        %3152 = vmatprep.subr.mxu0 %v3008
        %3153 = vmatpush1.msra.mxu0 %v3007
        %3154 = vmatprep.subr.mxu0 %v3010
        %3155 = vmatpush1.msra.mxu0 %v3009
        %3156 = vmatprep.subr.mxu0 %v3012
        %3157 = vmatpush1.msra.mxu0 %v3011
        %3158 = vmatprep.subr.mxu0 %v3014
        %3159 = vmatpush1.msra.mxu0 %v3013
        %3160 = vmatprep.subr.mxu0 %v3016
        %3161 = vmatpush1.msra.mxu0 %v3015
        %3162 = vmatprep.mubr.f32.mxu0 %v3020
        %3163 = vmatmul.mubr.f32.gmra.mrb[0].mxu0 %v3019
        %v3164 = vpop.f32.mrb[0].mxu0
        %v3165 = vadd.f32 %v3094, %v3164
        %v3166 = vpop.f32.mrb[0].mxu0
        %v3167 = vadd.f32 %v3096, %v3166
        %3168 = vdwg.mxu0
        %3169 = vst [vmem:[%s242] sm:$0xff] %v3165
        %3170 = vst [vmem:[%s242 + $0x8] sm:$0xff] %v3167
        %s3171 = sand.u32 %s153, 1
        %s3172 = scalar_lea.sflag [#allocation3], %s3171
        %s3173 = sand.u32 %s153, 1
        %s3174 = smul.addr %s3173, 16
        %s3175 = scalar_lea.vmem [#allocation2], %s3174
        // Predicated region
        $region41: #{tpu_custom_call.1} parent=39 // pred_check
          %p3176 = pneg %p163
        $region42: #{tpu_custom_call.1} parent=39 // pred_check_branch
          %3178 = sbr.rel (%p3176) target = $region44
        $region43: #{tpu_custom_call.1} parent=39 // pred_region
          %s3179 = smul.u32 2, %s24
          %s3181 = ssub.s32 256, 256
          %3182 = vsyncadd %s3172, %s3181
          %s3183 = smul.addr %s23, 2
          %s3184 = sadd.s32 %s3179, %s3183
          %s3185 = smul.addr %s3184, 128
          %s3186 = scalar_lea.hbm %s5, %s3185
          %s3188 = sshll.u32 %s3175, 4
          %s3189 = int_to_ptr.vmem [resolvable:$true] %s3188
          %3191 = dma.vmem_to_hbm [thread:$0]  %s3189, 256, %s3186, %s3172
        $region44: #{tpu_custom_call.1} parent=39 // pred_fallthru
          _
      $region40: #{tpu_custom_call.1} parent=5 // pred_fallthru
        _
      %p3192 = scmp.le.s32.totalorder 2, %s14
      // Predicated region
      $region45: #{tpu_custom_call.1} parent=5 // pred_check
        %p3193 = pneg %p3192
      $region46: #{tpu_custom_call.1} parent=5 // pred_check_branch
        %3195 = sbr.rel (%p3193) target = $region48
      $region47: #{tpu_custom_call.1} parent=5 // pred_region
        %s3196 = ssub.s32 %s14, 2
        // Predicated region
        $region49: #{tpu_custom_call.1} parent=47 // pred_check
          %p3197 = pneg %p169
        $region50: #{tpu_custom_call.1} parent=47 // pred_check_branch
          %3199 = sbr.rel (%p3197) target = $region52
        $region51: #{tpu_custom_call.1} parent=47 // pred_region
          %s3200 = sand.u32 %s154, 1
          %s3201 = scalar_lea.sflag [#allocation3], %s3200
          %s3202 = sand.u32 %s154, 1
          %s3203 = smul.addr %s3202, 16
          %s3204 = scalar_lea.vmem [#allocation2], %s3203
          %3205 = dma.done %s3201, 256
        $region52: #{tpu_custom_call.1} parent=47 // pred_fallthru
          _
      $region48: #{tpu_custom_call.1} parent=5 // pred_fallthru
        _
    $region6: #{tpu_custom_call.1} parent=1 // loop_footer
      %s18 = sadd.s32 1, %s14
    $region7: #{tpu_custom_call.1} parent=1 // loop_footer_branch
      %13 = sbr.rel target = $region3
    $region8: #{tpu_custom_call.1} parent=1 // loop_exit
      _
    %3206 = vsyncpa [#allocation3], 1
    %s3207 = scalar_lea.sflag [#allocation3], 1
    %3208 = vsyncpa %s3207, 1

</llo_original>
